<compile_context>
chip_gen: v6e
topology: v6e:2x2x1
jax: 0.10.0
libtpu: 0.0.40
codegen_flags: <defaults>
</compile_context>

<pallas_src>
import functools

import jax
import jax.numpy as jnp
from jax import lax
from jax.experimental import pallas as pl
from jax.experimental.pallas import tpu as pltpu

FEATURE_DIM = 576  # timm tf_mobilenetv3_small_minimal_100 feature_info[-1]['num_chs']
HEAD_DIM = 6       # nn.Linear(feature_dim, 6)
HEAD_PAD = 8       # sublane-padded head width inside the kernel (rows 6..7 zero)


def pose_encoder_kernel(hw, needs_mask,
                        x_ref, wp_ref, bp_ref, wh_ref, bh_ref, out_ref, acc_ref):
    """One grid step = one (batch, spatial-tile) pair.

    x_ref  : [1, C_in, tile] f32  image tile (channels-first, lane-dense spatial)
    wp_ref : [576, C_in]     f32  stand-in backbone pointwise projection (transposed)
    bp_ref : [576, 1]        f32
    wh_ref : [8, 576]        f32  head weight (transposed, rows 6..7 zero)
    bh_ref : [8, 1]          f32  head bias   (rows 6..7 zero)
    out_ref: [1, 8, 1]       f32  pose_cam column for this batch (rows 0:6 valid)
    acc_ref: [576, 1]        f32  per-batch running sum of features (VMEM scratch)
    """
    step = pl.program_id(1)
    tile = x_ref.shape[2]
    last = pl.num_programs(1) - 1

    @pl.when(step == 0)
    def _():
        acc_ref[...] = jnp.zeros_like(acc_ref)

    # Channel projection on the MXU: [576, C_in] @ [C_in, tile] -> [576, tile].
    # K=3 padding on the MXU is wasted-but-free capacity; keeps VPU/XLU free.
    x = x_ref[0]                                                    # [C_in, tile]
    feat = jnp.dot(wp_ref[...], x, preferred_element_type=jnp.float32)
    feat = jnp.maximum(feat + bp_ref[...], 0.0)                     # bias + ReLU

    # adaptive_avg_pool2d((1,1)): accumulate spatial sum; mean in the epilogue.
    # Spatial padding (if any) only affects the last tile, so the mask is
    # traced only when padding exists and executed only on the last step.
    if needs_mask:
        @pl.when(step == last)
        def _():
            col = lax.broadcasted_iota(jnp.int32, (1, tile), 1) + step * tile
            acc_ref[...] += jnp.where(col < hw, feat, 0.0).sum(axis=1, keepdims=True)

        @pl.when(step != last)
        def _():
            acc_ref[...] += feat.sum(axis=1, keepdims=True)
    else:
        acc_ref[...] += feat.sum(axis=1, keepdims=True)

    @pl.when(step == last)
    def _():
        pooled = acc_ref[...] * (1.0 / float(hw))                   # [576, 1]
        out_ref[0] = (
            jnp.dot(wh_ref[...], pooled, preferred_element_type=jnp.float32)
            + bh_ref[...]
        )                                                           # [8, 1]


def _select_tiling(hw, requested_tile):
    """Pick spatial tile (lane dim) and scoped-VMEM limit per TPU generation."""
    try:
        vmem_bytes = pltpu.get_tpu_info().vmem_capacity_bytes
    except Exception:
        vmem_bytes = 64 * 1024 * 1024              # assume smallest (v7x) if unknown
    if vmem_bytes >= 128 * 1024 * 1024:            # v5e / v6e: 128 MiB VMEM
        default_tile, vmem_limit = 8192, 96 * 1024 * 1024
    else:                                          # v7x: 64 MiB VMEM -> headroom
        default_tile, vmem_limit = 4096, 48 * 1024 * 1024
    tile = default_tile if requested_tile is None else requested_tile
    tile = min(tile, 8192)
    # Spatial positions live on the lane axis: keep tiles multiples of 128.
    tile = max(128, min(tile, pl.cdiv(hw, 128) * 128))
    tile = (tile // 128) * 128
    return tile, vmem_limit


def init_params(key, c_in=3):
    k1, k2, k3, k4 = jax.random.split(key, 4)
    # Stand-in backbone projection (deterministic synthetic weights).
    w_proj = jax.random.normal(k1, (c_in, FEATURE_DIM), jnp.float32) * 0.05
    b_proj = jax.random.normal(k2, (FEATURE_DIM,), jnp.float32) * 0.05

    # nn.Linear(feature_dim, 6) default init: U(-1/sqrt(fan_in), 1/sqrt(fan_in)).
    bound = 1.0 / (FEATURE_DIM ** 0.5)
    w_head = jax.random.uniform(k3, (FEATURE_DIM, HEAD_DIM), jnp.float32, -bound, bound)
    b_head = jax.random.uniform(k4, (HEAD_DIM,), jnp.float32, -bound, bound)
    # PoseEncoder.init_weights():
    #   weight *= 0.001 ; bias *= 0.001 ; weight[3] = 0 ; bias[3] = 7
    w_head = w_head * 0.001
    b_head = b_head * 0.001
    w_head = w_head.at[:, 3].set(0.0)   # weight stored transposed: [in, out]
    b_head = b_head.at[3].set(7.0)

    return {"w_proj": w_proj, "b_proj": b_proj, "w_head": w_head, "b_head": b_head}


def pose_encoder_forward(img, params, *, tile_s=None):
    """img: NCHW float32, matching the PyTorch module's input convention."""
    B, C_in, H, W = img.shape
    hw = H * W
    tile_s, vmem_limit = _select_tiling(hw, tile_s)

    # NCHW is already channels-first: flattening (H, W) is a pure reshape.
    # No wrapper transpose and no separate bf16 pre-cast pass (compute-bound).
    x = img.reshape(B, C_in, hw).astype(jnp.float32)
    hw_pad = pl.cdiv(hw, tile_s) * tile_s
    needs_mask = hw_pad != hw
    if needs_mask:
        x = jnp.pad(x, ((0, 0), (0, 0), (0, hw_pad - hw)))
    n_s = hw_pad // tile_s

    # Weights in kernel orientation: features on sublanes, lane-dense spatial.
    wp_t = jnp.asarray(params["w_proj"], jnp.float32).T                 # [576, C_in]
    bp_t = jnp.asarray(params["b_proj"], jnp.float32).reshape(FEATURE_DIM, 1)
    wh_t = jnp.zeros((HEAD_PAD, FEATURE_DIM), jnp.float32).at[:HEAD_DIM, :].set(
        jnp.asarray(params["w_head"], jnp.float32).T)                   # [8, 576]
    bh_t = jnp.zeros((HEAD_PAD, 1), jnp.float32).at[:HEAD_DIM, 0].set(
        jnp.asarray(params["b_head"], jnp.float32))                     # [8, 1]

    flops = 2 * B * hw_pad * C_in * FEATURE_DIM + 2 * B * FEATURE_DIM * HEAD_PAD
    bytes_accessed = (
        B * hw_pad * C_in * 4                   # f32 image
        + FEATURE_DIM * (C_in + 1) * 4          # projection weights / bias
        + HEAD_PAD * (FEATURE_DIM + 1) * 4      # head weights / bias
        + B * HEAD_PAD * 4                      # output
    )

    grid_spec = pltpu.PrefetchScalarGridSpec(
        num_scalar_prefetch=0,
        grid=(B, n_s),
        in_specs=[
            pl.BlockSpec((1, C_in, tile_s), lambda b, s: (b, 0, s)),
            pl.BlockSpec((FEATURE_DIM, C_in), lambda b, s: (0, 0)),
            pl.BlockSpec((FEATURE_DIM, 1), lambda b, s: (0, 0)),
            pl.BlockSpec((HEAD_PAD, FEATURE_DIM), lambda b, s: (0, 0)),
            pl.BlockSpec((HEAD_PAD, 1), lambda b, s: (0, 0)),
        ],
        out_specs=pl.BlockSpec((1, HEAD_PAD, 1), lambda b, s: (b, 0, 0)),
        scratch_shapes=[pltpu.VMEM((FEATURE_DIM, 1), jnp.float32)],
    )

    out = pl.pallas_call(
        functools.partial(pose_encoder_kernel, hw, needs_mask),
        out_shape=jax.ShapeDtypeStruct((B, HEAD_PAD, 1), jnp.float32),
        grid_spec=grid_spec,
        compiler_params=pltpu.CompilerParams(
            # Batch axis shards across v7x's two TensorCores; spatial axis is
            # the accumulation loop.
            # TODO(synk): for B == 1 on v7x, add a parallel spatial split with
            # per-core partial sums so both TensorCores are used.
            dimension_semantics=("parallel", "arbitrary"),
            vmem_limit_bytes=vmem_limit,
        ),
        cost_estimate=pl.CostEstimate(
            flops=flops, transcendentals=0, bytes_accessed=bytes_accessed),
    )(x, wp_t, bp_t, wh_t, bh_t)

    pose_cam = out[:, :HEAD_DIM, 0].reshape(B, -1)
    return {"pose_params": pose_cam[..., :3], "cam": pose_cam[..., 3:]}


def pose_encoder_reference(img, params):
    """Pure-JAX f32 reference for correctness checking."""
    B, C_in, H, W = img.shape
    x = img.reshape(B, C_in, H * W).transpose(0, 2, 1).astype(jnp.float32)  # [B,HW,C]
    feat = jnp.maximum(x @ params["w_proj"] + params["b_proj"], 0.0)        # [B,HW,576]
    pooled = feat.mean(axis=1)                                              # [B,576]
    pose_cam = pooled @ params["w_head"] + params["b_head"]                 # [B,6]
    return {"pose_params": pose_cam[..., :3], "cam": pose_cam[..., 3:]}


if __name__ == "__main__":
    key = jax.random.PRNGKey(0)
    k_img, k_img2, k_par = jax.random.split(key, 3)
    params = init_params(k_par, c_in=3)

    # Case 1: batch=2, RGB, 16x16 -> hw=256; tile_s=128 gives 2 spatial grid
    # steps (exercises the accumulate + epilogue path, no padding).
    img = jax.random.normal(k_img, (2, 3, 16, 16), jnp.float32)
    out = pose_encoder_forward(img, params, tile_s=128)
    out = jax.tree_util.tree_map(jax.block_until_ready, out)
    ref = pose_encoder_reference(img, params)

    assert out["pose_params"].shape == (2, 3)
    assert out["cam"].shape == (2, 3)
    assert bool(jnp.all(jnp.isfinite(out["pose_params"])))
    assert bool(jnp.all(jnp.isfinite(out["cam"])))
    # Loose tolerance: MXU default precision vs f32 reference.
    assert bool(jnp.allclose(out["pose_params"], ref["pose_params"], atol=2e-2, rtol=1e-2))
    assert bool(jnp.allclose(out["cam"], ref["cam"], atol=2e-2, rtol=1e-2))

    # Case 2: ragged spatial extent (hw=240 -> padded to 256) exercises the
    # last-step padding mask.
    img2 = jax.random.normal(k_img2, (1, 3, 12, 20), jnp.float32)
    out2 = pose_encoder_forward(img2, params, tile_s=128)
    out2 = jax.tree_util.tree_map(jax.block_until_ready, out2)
    ref2 = pose_encoder_reference(img2, params)

    assert out2["pose_params"].shape == (1, 3)
    assert out2["cam"].shape == (1, 3)
    assert bool(jnp.allclose(out2["pose_params"], ref2["pose_params"], atol=2e-2, rtol=1e-2))
    assert bool(jnp.allclose(out2["cam"], ref2["cam"], atol=2e-2, rtol=1e-2))

    print("KERNEL_OK")
</pallas_src>

<mosaic_0001>
module attributes {stable_mosaic.version = 11 : i64} {
  func.func @pose_encoder_kernel(%arg0: i32, %arg1: i32, %arg2: memref<1x3x128xf32, #tpu.memory_space<vmem>>, %arg3: memref<576x3xf32, #tpu.memory_space<vmem>>, %arg4: memref<576x1xf32, #tpu.memory_space<vmem>>, %arg5: memref<8x576xf32, #tpu.memory_space<vmem>>, %arg6: memref<8x1xf32, #tpu.memory_space<vmem>>, %arg7: memref<1x8x1xf32, #tpu.memory_space<vmem>>, %arg8: memref<576x1xf32, #tpu.memory_space<vmem>>) attributes {dimension_semantics = [#tpu.dimension_semantics<parallel>, #tpu.dimension_semantics<arbitrary>], iteration_bounds = array<i64: 2, 2>, scalar_prefetch = 0 : i64, scratch_operands = 1 : i64, tpu.core_type = #tpu.core_type<tc>, window_params = [{transform_indices = @transform_0, window_bounds = array<i64: 1, 3, 128>}, {pipeline_mode = #tpu.pipeline_mode<synchronous>, transform_indices = @transform_1, window_bounds = array<i64: 576, 3>}, {pipeline_mode = #tpu.pipeline_mode<synchronous>, transform_indices = @transform_2, window_bounds = array<i64: 576, 1>}, {pipeline_mode = #tpu.pipeline_mode<synchronous>, transform_indices = @transform_3, window_bounds = array<i64: 8, 576>}, {pipeline_mode = #tpu.pipeline_mode<synchronous>, transform_indices = @transform_4, window_bounds = array<i64: 8, 1>}, {transform_indices = @transform_5, window_bounds = array<i64: 1, 8, 1>}]} {
    %c0_i32 = arith.constant 0 : i32
    %0 = arith.cmpi eq, %arg1, %c0_i32 : i32
    %1 = arith.extui %0 : i1 to i32
    %c0_i32_0 = arith.constant 0 : i32
    %2 = arith.cmpi ne, %1, %c0_i32_0 : i32
    scf.if %2 {
      %cst_14 = arith.constant 0.000000e+00 : f32
      %20 = vector.broadcast %cst_14 : f32 to vector<576x1xf32>
      %c0_15 = arith.constant 0 : index
      %c0_16 = arith.constant 0 : index
      %21 = vector.load %arg8[%c0_15, %c0_16] : memref<576x1xf32, #tpu.memory_space<vmem>>, vector<576x1xf32>
      tpu.vector_store %arg8[%c0_15, %c0_16], %20 {strides = array<i32>} : memref<576x1xf32, #tpu.memory_space<vmem>>, vector<576x1xf32>,
    } else {
    }
    %c0 = arith.constant 0 : index
    %c0_1 = arith.constant 0 : index
    %c0_2 = arith.constant 0 : index
    %3 = vector.load %arg2[%c0, %c0_1, %c0_2] : memref<1x3x128xf32, #tpu.memory_space<vmem>>, vector<1x3x128xf32>
    %4 = vector.shape_cast %3 : vector<1x3x128xf32> to vector<3x128xf32>
    %c0_3 = arith.constant 0 : index
    %c0_4 = arith.constant 0 : index
    %5 = vector.load %arg3[%c0_3, %c0_4] : memref<576x3xf32, #tpu.memory_space<vmem>>, vector<576x3xf32>
    %cst = arith.constant dense<0.000000e+00> : vector<576x128xf32>
    %6 = tpu.matmul %5, %4, %cst {dimension_numbers = #tpu.dot_dimension_numbers<[1], [0], [0], [1], [0, 0, 1, 1], [], []>} : vector<576x3xf32>, vector<3x128xf32>, vector<576x128xf32> -> vector<576x128xf32>
    %c0_5 = arith.constant 0 : index
    %c0_6 = arith.constant 0 : index
    %7 = vector.load %arg4[%c0_5, %c0_6] : memref<576x1xf32, #tpu.memory_space<vmem>>, vector<576x1xf32>
    %8 = vector.broadcast %7 : vector<576x1xf32> to vector<576x128xf32>
    %9 = arith.addf %6, %8 : vector<576x128xf32>
    %cst_7 = arith.constant 0.000000e+00 : f32
    %10 = vector.broadcast %cst_7 : f32 to vector<576x128xf32>
    %11 = arith.maximumf %9, %10 : vector<576x128xf32>
    %c0_8 = arith.constant 0 : index
    %c0_9 = arith.constant 0 : index
    %12 = vector.load %arg8[%c0_8, %c0_9] : memref<576x1xf32, #tpu.memory_space<vmem>>, vector<576x1xf32>
    %cst_10 = arith.constant dense<0.000000e+00> : vector<576xf32>
    %13 = vector.multi_reduction <add>, %11, %cst_10 [1] : vector<576x128xf32> to vector<576xf32>
    %14 = vector.shape_cast %13 : vector<576xf32> to vector<576x1xf32>
    %15 = arith.addf %12, %14 : vector<576x1xf32>
    %c0_11 = arith.constant 0 : index
    %c0_12 = arith.constant 0 : index
    %16 = vector.load %arg8[%c0_11, %c0_12] : memref<576x1xf32, #tpu.memory_space<vmem>>, vector<576x1xf32>
    tpu.vector_store %arg8[%c0_11, %c0_12], %15 {strides = array<i32>} : memref<576x1xf32, #tpu.memory_space<vmem>>, vector<576x1xf32>,
    %c1_i32 = arith.constant 1 : i32
    %17 = arith.cmpi eq, %arg1, %c1_i32 : i32
    %18 = arith.extui %17 : i1 to i32
    %c0_i32_13 = arith.constant 0 : i32
    %19 = arith.cmpi ne, %18, %c0_i32_13 : i32
    scf.if %19 {
      %c0_14 = arith.constant 0 : index
      %c0_15 = arith.constant 0 : index
      %20 = vector.load %arg8[%c0_14, %c0_15] : memref<576x1xf32, #tpu.memory_space<vmem>>, vector<576x1xf32>
      %cst_16 = arith.constant 3.906250e-03 : f32
      %21 = vector.broadcast %cst_16 : f32 to vector<576x1xf32>
      %22 = arith.mulf %20, %21 : vector<576x1xf32>
      %c0_17 = arith.constant 0 : index
      %c0_18 = arith.constant 0 : index
      %23 = vector.load %arg5[%c0_17, %c0_18] : memref<8x576xf32, #tpu.memory_space<vmem>>, vector<8x576xf32>
      %cst_19 = arith.constant dense<0.000000e+00> : vector<8x1xf32>
      %24 = tpu.matmul %23, %22, %cst_19 {dimension_numbers = #tpu.dot_dimension_numbers<[1], [0], [0], [1], [0, 0, 1, 1], [], []>} : vector<8x576xf32>, vector<576x1xf32>, vector<8x1xf32> -> vector<8x1xf32>
      %c0_20 = arith.constant 0 : index
      %c0_21 = arith.constant 0 : index
      %25 = vector.load %arg6[%c0_20, %c0_21] : memref<8x1xf32, #tpu.memory_space<vmem>>, vector<8x1xf32>
      %26 = arith.addf %24, %25 : vector<8x1xf32>
      %c0_22 = arith.constant 0 : index
      %c0_23 = arith.constant 0 : index
      %c0_24 = arith.constant 0 : index
      %27 = vector.load %arg7[%c0_22, %c0_23, %c0_24] : memref<1x8x1xf32, #tpu.memory_space<vmem>>, vector<1x8x1xf32>
      %28 = vector.shape_cast %27 : vector<1x8x1xf32> to vector<8x1xf32>
      %29 = vector.shape_cast %26 : vector<8x1xf32> to vector<1x8x1xf32>
      tpu.vector_store %arg7[%c0_22, %c0_23, %c0_24], %29 {strides = array<i32>} : memref<1x8x1xf32, #tpu.memory_space<vmem>>, vector<1x8x1xf32>,
    } else {
    }
    return
  }
  func.func @transform_0(%arg0: i32, %arg1: i32) -> (i32, i32, i32) {
    %c0_i32 = arith.constant 0 : i32
    %c0_i32_0 = arith.constant 0 : i32
    return %arg0, %c0_i32, %arg1 : i32, i32, i32
  }
  func.func @transform_1(%arg0: i32, %arg1: i32) -> (i32, i32) {
    %c0_i32 = arith.constant 0 : i32
    %c0_i32_0 = arith.constant 0 : i32
    %c0_i32_1 = arith.constant 0 : i32
    return %c0_i32, %c0_i32_0 : i32, i32
  }
  func.func @transform_2(%arg0: i32, %arg1: i32) -> (i32, i32) {
    %c0_i32 = arith.constant 0 : i32
    %c0_i32_0 = arith.constant 0 : i32
    %c0_i32_1 = arith.constant 0 : i32
    return %c0_i32, %c0_i32_0 : i32, i32
  }
  func.func @transform_3(%arg0: i32, %arg1: i32) -> (i32, i32) {
    %c0_i32 = arith.constant 0 : i32
    %c0_i32_0 = arith.constant 0 : i32
    %c0_i32_1 = arith.constant 0 : i32
    return %c0_i32, %c0_i32_0 : i32, i32
  }
  func.func @transform_4(%arg0: i32, %arg1: i32) -> (i32, i32) {
    %c0_i32 = arith.constant 0 : i32
    %c0_i32_0 = arith.constant 0 : i32
    %c0_i32_1 = arith.constant 0 : i32
    return %c0_i32, %c0_i32_0 : i32, i32
  }
  func.func @transform_5(%arg0: i32, %arg1: i32) -> (i32, i32, i32) {
    %c0_i32 = arith.constant 0 : i32
    %c0_i32_0 = arith.constant 0 : i32
    %c0_i32_1 = arith.constant 0 : i32
    return %arg0, %c0_i32, %c0_i32_0 : i32, i32, i32
  }
}

</mosaic_0001>

<llo_original>
// kernel: tpu_custom_call.1
$region0: #{tpu_custom_call.1}
  #allocation0 [shape = 'u32[]', space=smem, size = 0x4, offset = 0x4, fixed_abs, tag = 'smem constant byte address 0x4 - core index']
  #allocation1 [shape = 'u32[144,128]{1,0:T(1,128)}', space=vmem, size = 0x12000, scoped, tag = 'internal scratch']
  #allocation2 [shape = 'f32[576,1]{1,0:T(8,128)}', space=vmem, size = 0x48000, scoped, tag = 'scratch operand']
  %s0 = inlined_call_operand.vmem [shape: f32[2,3,256], index: 0, kind: input, shape index: {}]
  %s1 = inlined_call_operand.vmem [shape: f32[576,3], index: 1, kind: input, shape index: {}]
  %s2 = inlined_call_operand.vmem [shape: f32[576,1], index: 2, kind: input, shape index: {}]
  %s3 = inlined_call_operand.vmem [shape: f32[8,576], index: 3, kind: input, shape index: {}]
  %s4 = inlined_call_operand.vmem [shape: f32[8,1], index: 4, kind: input, shape index: {}]
  %s5 = inlined_call_operand.vmem [shape: f32[2,8,1], index: 5, kind: output, shape index: {}]
  %s6 = sld [smem:[#allocation0]]
  $region61: #{tpu_custom_call.1} parent=0
    _
  %s8 = ssub.s32 1, %s6
  %s9 = scalar_select 0, %s8, %s6
  loop: start=0, step=1, limit=6
  $region2: #{tpu_custom_call.1} parent=0 // loop_pre_header
    _
  $region3: #{tpu_custom_call.1} parent=0 // loop_header
    %s11 = sphi 0, %s15
    %p12 = scmp.ge.s32.totalorder %s11, 6
    %s18 = sphi 0, %s30
    %s19 = sphi 0, %s26
    %s20 = sphi 0, %s18
    %s21 = sphi 0, %s19
    %s22 = sphi 0, %s20
    %s23 = sphi 0, %s21
    %s35 = sphi 0, %s37
    %s38 = sphi 0, %s35
    %s39 = sphi 0, %s38
    %s55 = sphi 0, %s39
    %s59 = sphi 0, %s59
    %s61 = sphi 0, %s59
    %s62 = sphi 0, %s61
    %s76 = sphi 0, %s62
    %s80 = sphi 0, %s80
    %s82 = sphi 0, %s80
    %s83 = sphi 0, %s82
    %s97 = sphi 0, %s83
    %s101 = sphi 0, %s101
    %s103 = sphi 0, %s101
    %s104 = sphi 0, %s103
    %s118 = sphi 0, %s104
    %s122 = sphi 0, %s122
    %s124 = sphi 0, %s122
    %s125 = sphi 0, %s124
    %s139 = sphi 0, %s125
    %s145 = sphi 0, %s147
    %s148 = sphi 0, %s145
    %s149 = sphi 0, %s148
    %s165 = sphi 0, %s149
  $region4: #{tpu_custom_call.1} parent=0 // loop_header_branch
    %14 = sbr.rel (%p12) target = $region8
  $region5: #{tpu_custom_call.1} parent=0 // loop_body
    %s16 = ssub.s32 %s11, 1
    %s17 = ssub.s32 %s11, 2
    %s24 = sadd.s32 1, %s19
    %p25 = scmp.ge.s32.totalorder %s24, 2
    %s26 = scalar_select %p25, 0, %s24
    %s27 = sadd.s32 1, %s18
    %s28 = scalar_select %p25, %s27, %s18
    %p29 = scmp.ge.s32.totalorder %s28, 2
    %s30 = scalar_select %p29, 0, %s28
    %s31 = ssub.s32 %s18, %s30
    %s32 = ssub.s32 %s19, %s26
    %s33 = sor.u32 %s31, %s32
    %p34 = scmp.eq.s32.totalorder %s33, 0
    %s36 = sadd.s32 %s35, 1
    %s37 = scalar_select %p34, %s35, %s36
    %p40 = pneg %p34
    %p41 = scmp.eq.s32.totalorder %s11, 3
    %p42 = por %p40, %p41
    %p43 = scmp.ne.s32.totalorder %s35, %s38
    %p44 = scmp.eq.s32.totalorder %s11, 0
    %p45 = por %p43, %p44
    %p46 = scmp.ne.s32.totalorder %s35, %s38
    %p47 = scmp.eq.s32.totalorder %s16, 3
    %p48 = por %p46, %p47
    %p49 = scmp.ne.s32.totalorder %s38, %s39
    %p50 = scmp.eq.s32.totalorder %s16, 0
    %p51 = por %p49, %p50
    %p52 = scmp.ne.s32.totalorder %s38, %s39
    %p53 = scmp.eq.s32.totalorder %s17, 3
    %p54 = por %p52, %p53
    %p56 = scmp.ne.s32.totalorder %s39, %s55
    %p57 = scmp.eq.s32.totalorder %s17, 0
    %p58 = por %p56, %p57
    %s60 = sadd.s32 %s59, 1
    %p63 = scmp.eq.s32.totalorder %s11, 3
    %p64 = scmp.ne.s32.totalorder %s59, %s61
    %p65 = scmp.eq.s32.totalorder %s11, 0
    %p66 = por %p64, %p65
    %p67 = scmp.ne.s32.totalorder %s59, %s61
    %p68 = scmp.eq.s32.totalorder %s16, 3
    %p69 = por %p67, %p68
    %p70 = scmp.ne.s32.totalorder %s61, %s62
    %p71 = scmp.eq.s32.totalorder %s16, 0
    %p72 = por %p70, %p71
    %p73 = scmp.ne.s32.totalorder %s61, %s62
    %p74 = scmp.eq.s32.totalorder %s17, 3
    %p75 = por %p73, %p74
    %p77 = scmp.ne.s32.totalorder %s62, %s76
    %p78 = scmp.eq.s32.totalorder %s17, 0
    %p79 = por %p77, %p78
    %s81 = sadd.s32 %s80, 1
    %p84 = scmp.eq.s32.totalorder %s11, 3
    %p85 = scmp.ne.s32.totalorder %s80, %s82
    %p86 = scmp.eq.s32.totalorder %s11, 0
    %p87 = por %p85, %p86
    %p88 = scmp.ne.s32.totalorder %s80, %s82
    %p89 = scmp.eq.s32.totalorder %s16, 3
    %p90 = por %p88, %p89
    %p91 = scmp.ne.s32.totalorder %s82, %s83
    %p92 = scmp.eq.s32.totalorder %s16, 0
    %p93 = por %p91, %p92
    %p94 = scmp.ne.s32.totalorder %s82, %s83
    %p95 = scmp.eq.s32.totalorder %s17, 3
    %p96 = por %p94, %p95
    %p98 = scmp.ne.s32.totalorder %s83, %s97
    %p99 = scmp.eq.s32.totalorder %s17, 0
    %p100 = por %p98, %p99
    %s102 = sadd.s32 %s101, 1
    %p105 = scmp.eq.s32.totalorder %s11, 3
    %p106 = scmp.ne.s32.totalorder %s101, %s103
    %p107 = scmp.eq.s32.totalorder %s11, 0
    %p108 = por %p106, %p107
    %p109 = scmp.ne.s32.totalorder %s101, %s103
    %p110 = scmp.eq.s32.totalorder %s16, 3
    %p111 = por %p109, %p110
    %p112 = scmp.ne.s32.totalorder %s103, %s104
    %p113 = scmp.eq.s32.totalorder %s16, 0
    %p114 = por %p112, %p113
    %p115 = scmp.ne.s32.totalorder %s103, %s104
    %p116 = scmp.eq.s32.totalorder %s17, 3
    %p117 = por %p115, %p116
    %p119 = scmp.ne.s32.totalorder %s104, %s118
    %p120 = scmp.eq.s32.totalorder %s17, 0
    %p121 = por %p119, %p120
    %s123 = sadd.s32 %s122, 1
    %p126 = scmp.eq.s32.totalorder %s11, 3
    %p127 = scmp.ne.s32.totalorder %s122, %s124
    %p128 = scmp.eq.s32.totalorder %s11, 0
    %p129 = por %p127, %p128
    %p130 = scmp.ne.s32.totalorder %s122, %s124
    %p131 = scmp.eq.s32.totalorder %s16, 3
    %p132 = por %p130, %p131
    %p133 = scmp.ne.s32.totalorder %s124, %s125
    %p134 = scmp.eq.s32.totalorder %s16, 0
    %p135 = por %p133, %p134
    %p136 = scmp.ne.s32.totalorder %s124, %s125
    %p137 = scmp.eq.s32.totalorder %s17, 3
    %p138 = por %p136, %p137
    %p140 = scmp.ne.s32.totalorder %s125, %s139
    %p141 = scmp.eq.s32.totalorder %s17, 0
    %p142 = por %p140, %p141
    %s143 = ssub.s32 %s18, %s30
    %p144 = scmp.eq.s32.totalorder %s143, 0
    %s146 = sadd.s32 %s145, 1
    %s147 = scalar_select %p144, %s145, %s146
    %p150 = pneg %p144
    %p151 = scmp.eq.s32.totalorder %s11, 3
    %p152 = por %p150, %p151
    %p153 = scmp.ne.s32.totalorder %s145, %s148
    %p154 = scmp.eq.s32.totalorder %s11, 0
    %p155 = por %p153, %p154
    %p156 = scmp.ne.s32.totalorder %s145, %s148
    %p157 = scmp.eq.s32.totalorder %s16, 3
    %p158 = por %p156, %p157
    %p159 = scmp.ne.s32.totalorder %s148, %s149
    %p160 = scmp.eq.s32.totalorder %s16, 0
    %p161 = por %p159, %p160
    %p162 = scmp.ne.s32.totalorder %s148, %s149
    %p163 = scmp.eq.s32.totalorder %s17, 3
    %p164 = por %p162, %p163
    %p166 = scmp.ne.s32.totalorder %s149, %s165
    %p167 = scmp.eq.s32.totalorder %s17, 0
    %p168 = por %p166, %p167
    %p169 = scmp.le.s32.totalorder 1, %s11
    %p170 = scmp.lt.s32.totalorder %s11, 5
    %p171 = pnand %p169, %p170
    %p172 = pneg %p171
    // Predicated region
    $region9: #{tpu_custom_call.1} parent=5 // pred_check
      _
    $region10: #{tpu_custom_call.1} parent=5 // pred_check_branch
      %174 = sbr.rel (%p171) target = $region12
    $region11: #{tpu_custom_call.1} parent=5 // pred_region
      %s175 = ssub.s32 %s11, 1
      // Predicated region
      $region13: #{tpu_custom_call.1} parent=11 // pred_check
        %p176 = pneg %p72
      $region14: #{tpu_custom_call.1} parent=11 // pred_check_branch
        %178 = sbr.rel (%p176) target = $region16
      $region15: #{tpu_custom_call.1} parent=11 // pred_region
        _
      $region16: #{tpu_custom_call.1} parent=11 // pred_fallthru
        _
      // Predicated region
      $region17: #{tpu_custom_call.1} parent=11 // pred_check
        %p179 = pneg %p93
      $region18: #{tpu_custom_call.1} parent=11 // pred_check_branch
        %181 = sbr.rel (%p179) target = $region20
      $region19: #{tpu_custom_call.1} parent=11 // pred_region
        _
      $region20: #{tpu_custom_call.1} parent=11 // pred_fallthru
        _
      // Predicated region
      $region21: #{tpu_custom_call.1} parent=11 // pred_check
        %p182 = pneg %p114
      $region22: #{tpu_custom_call.1} parent=11 // pred_check_branch
        %184 = sbr.rel (%p182) target = $region24
      $region23: #{tpu_custom_call.1} parent=11 // pred_region
        _
      $region24: #{tpu_custom_call.1} parent=11 // pred_fallthru
        _
      // Predicated region
      $region25: #{tpu_custom_call.1} parent=11 // pred_check
        %p185 = pneg %p135
      $region26: #{tpu_custom_call.1} parent=11 // pred_check_branch
        %187 = sbr.rel (%p185) target = $region28
      $region27: #{tpu_custom_call.1} parent=11 // pred_region
        _
      $region28: #{tpu_custom_call.1} parent=11 // pred_fallthru
        _
    $region12: #{tpu_custom_call.1} parent=5 // pred_fallthru
      _
    %p188 = scmp.lt.s32.totalorder %s11, 4
    // Predicated region
    $region29: #{tpu_custom_call.1} parent=5 // pred_check
      %p189 = pneg %p188
    $region30: #{tpu_custom_call.1} parent=5 // pred_check_branch
      %191 = sbr.rel (%p189) target = $region32
    $region31: #{tpu_custom_call.1} parent=5 // pred_region
      // Predicated region
      $region33: #{tpu_custom_call.1} parent=31 // pred_check
        %p192 = pneg %p45
      $region34: #{tpu_custom_call.1} parent=31 // pred_check_branch
        %194 = sbr.rel (%p192) target = $region36
      $region35: #{tpu_custom_call.1} parent=31 // pred_region
        %p195 = scmp.lt.s32.totalorder %s18, 1
        %s196 = scalar_select %p195, %s18, 1
        %p197 = scmp.lt.s32.totalorder %s19, 1
        %s198 = scalar_select %p197, %s19, 1
        %s199 = smul.addr %s196, 2
        %s200 = sadd.s32 %s198, %s199
        %s201 = smul.addr %s200, 4
        %s202 = scalar_lea.vmem %s0, %s201
      $region36: #{tpu_custom_call.1} parent=31 // pred_fallthru
        _
    $region32: #{tpu_custom_call.1} parent=5 // pred_fallthru
      _
    %p203 = scmp.le.s32.totalorder 1, %s11
    %p204 = scmp.lt.s32.totalorder %s11, 5
    %p205 = pnand %p203, %p204
    %p206 = pneg %p205
    // Predicated region
    $region37: #{tpu_custom_call.1} parent=5 // pred_check
      _
    $region38: #{tpu_custom_call.1} parent=5 // pred_check_branch
      %208 = sbr.rel (%p205) target = $region40
    $region39: #{tpu_custom_call.1} parent=5 // pred_region
      %s209 = ssub.s32 %s11, 1
      %p210 = scmp.lt.s32.totalorder %s20, 1
      %s211 = scalar_select %p210, %s20, 1
      %p212 = scmp.lt.s32.totalorder %s21, 1
      %s213 = scalar_select %p212, %s21, 1
      %s214 = smul.addr %s211, 2
      %s215 = sadd.s32 %s213, %s214
      %s216 = smul.addr %s215, 4
      %s217 = scalar_lea.vmem %s0, %s216
      %p218 = pneg %p51
      %p219 = pneg %p48
      %p220 = pneg %p72
      %p221 = pneg %p69
      %p222 = pneg %p93
      %p223 = pneg %p90
      %p224 = pneg %p114
      %p225 = pneg %p111
      %p226 = pneg %p135
      %p227 = pneg %p132
      %p228 = pneg %p161
      %p229 = pneg %p158
      %p230 = scmp.lt.s32.totalorder %s20, 1
      %s231 = scalar_select %p230, %s20, 1
      %s232 = smul.addr %s231, 8
      %s233 = scalar_lea.vmem %s5, %s232
      %p234 = scmp.lt.s32.totalorder %s20, 1
      %s235 = scalar_select %p234, %s20, 1
      %p236 = scmp.lt.s32.totalorder %s21, 1
      %s237 = scalar_select %p236, %s21, 1
      %s238 = smul.addr %s235, 2
      %s239 = sadd.s32 %s237, %s238
      %s240 = smul.addr %s239, 4
      %s241 = scalar_lea.vmem %s0, %s240
      %p242 = scmp.lt.s32.totalorder %s20, 1
      %s243 = scalar_select %p242, %s20, 1
      %s244 = smul.addr %s243, 8
      %s245 = scalar_lea.vmem %s5, %s244
      %p246 = scmp.eq.s32.totalorder %s21, 0
      // Predicated region
      $region41: #{tpu_custom_call.1} parent=39 // pred_check
        %p247 = pneg %p246
      $region42: #{tpu_custom_call.1} parent=39 // pred_check_branch
        %249 = sbr.rel (%p247) target = $region44
      $region43: #{tpu_custom_call.1} parent=39 // pred_region
        %vm250 = vcmask 7168
        %251 = vst.msk [vmem:[#allocation2] sm:$0xff] %vm250, 0.0
        %252 = vst.msk [vmem:[#allocation2 + $0x8] sm:$0xff] %vm250, 0.0
        %253 = vst.msk [vmem:[#allocation2 + $0x10] sm:$0xff] %vm250, 0.0
        %254 = vst.msk [vmem:[#allocation2 + $0x18] sm:$0xff] %vm250, 0.0
        %255 = vst.msk [vmem:[#allocation2 + $0x20] sm:$0xff] %vm250, 0.0
        %256 = vst.msk [vmem:[#allocation2 + $0x28] sm:$0xff] %vm250, 0.0
        %257 = vst.msk [vmem:[#allocation2 + $0x30] sm:$0xff] %vm250, 0.0
        %258 = vst.msk [vmem:[#allocation2 + $0x38] sm:$0xff] %vm250, 0.0
        %259 = vst.msk [vmem:[#allocation2 + $0x40] sm:$0xff] %vm250, 0.0
        %260 = vst.msk [vmem:[#allocation2 + $0x48] sm:$0xff] %vm250, 0.0
        %261 = vst.msk [vmem:[#allocation2 + $0x50] sm:$0xff] %vm250, 0.0
        %262 = vst.msk [vmem:[#allocation2 + $0x58] sm:$0xff] %vm250, 0.0
        %263 = vst.msk [vmem:[#allocation2 + $0x60] sm:$0xff] %vm250, 0.0
        %264 = vst.msk [vmem:[#allocation2 + $0x68] sm:$0xff] %vm250, 0.0
        %265 = vst.msk [vmem:[#allocation2 + $0x70] sm:$0xff] %vm250, 0.0
        %266 = vst.msk [vmem:[#allocation2 + $0x78] sm:$0xff] %vm250, 0.0
        %267 = vst.msk [vmem:[#allocation2 + $0x80] sm:$0xff] %vm250, 0.0
        %268 = vst.msk [vmem:[#allocation2 + $0x88] sm:$0xff] %vm250, 0.0
        %269 = vst.msk [vmem:[#allocation2 + $0x90] sm:$0xff] %vm250, 0.0
        %270 = vst.msk [vmem:[#allocation2 + $0x98] sm:$0xff] %vm250, 0.0
        %271 = vst.msk [vmem:[#allocation2 + $0xa0] sm:$0xff] %vm250, 0.0
        %272 = vst.msk [vmem:[#allocation2 + $0xa8] sm:$0xff] %vm250, 0.0
        %273 = vst.msk [vmem:[#allocation2 + $0xb0] sm:$0xff] %vm250, 0.0
        %274 = vst.msk [vmem:[#allocation2 + $0xb8] sm:$0xff] %vm250, 0.0
        %275 = vst.msk [vmem:[#allocation2 + $0xc0] sm:$0xff] %vm250, 0.0
        %276 = vst.msk [vmem:[#allocation2 + $0xc8] sm:$0xff] %vm250, 0.0
        %277 = vst.msk [vmem:[#allocation2 + $0xd0] sm:$0xff] %vm250, 0.0
        %278 = vst.msk [vmem:[#allocation2 + $0xd8] sm:$0xff] %vm250, 0.0
        %279 = vst.msk [vmem:[#allocation2 + $0xe0] sm:$0xff] %vm250, 0.0
        %280 = vst.msk [vmem:[#allocation2 + $0xe8] sm:$0xff] %vm250, 0.0
        %281 = vst.msk [vmem:[#allocation2 + $0xf0] sm:$0xff] %vm250, 0.0
        %282 = vst.msk [vmem:[#allocation2 + $0xf8] sm:$0xff] %vm250, 0.0
        %283 = vst.msk [vmem:[#allocation2 + $0x100] sm:$0xff] %vm250, 0.0
        %284 = vst.msk [vmem:[#allocation2 + $0x108] sm:$0xff] %vm250, 0.0
        %285 = vst.msk [vmem:[#allocation2 + $0x110] sm:$0xff] %vm250, 0.0
        %286 = vst.msk [vmem:[#allocation2 + $0x118] sm:$0xff] %vm250, 0.0
        %287 = vst.msk [vmem:[#allocation2 + $0x120] sm:$0xff] %vm250, 0.0
        %288 = vst.msk [vmem:[#allocation2 + $0x128] sm:$0xff] %vm250, 0.0
        %289 = vst.msk [vmem:[#allocation2 + $0x130] sm:$0xff] %vm250, 0.0
        %290 = vst.msk [vmem:[#allocation2 + $0x138] sm:$0xff] %vm250, 0.0
        %291 = vst.msk [vmem:[#allocation2 + $0x140] sm:$0xff] %vm250, 0.0
        %292 = vst.msk [vmem:[#allocation2 + $0x148] sm:$0xff] %vm250, 0.0
        %293 = vst.msk [vmem:[#allocation2 + $0x150] sm:$0xff] %vm250, 0.0
        %294 = vst.msk [vmem:[#allocation2 + $0x158] sm:$0xff] %vm250, 0.0
        %295 = vst.msk [vmem:[#allocation2 + $0x160] sm:$0xff] %vm250, 0.0
        %296 = vst.msk [vmem:[#allocation2 + $0x168] sm:$0xff] %vm250, 0.0
        %297 = vst.msk [vmem:[#allocation2 + $0x170] sm:$0xff] %vm250, 0.0
        %298 = vst.msk [vmem:[#allocation2 + $0x178] sm:$0xff] %vm250, 0.0
        %299 = vst.msk [vmem:[#allocation2 + $0x180] sm:$0xff] %vm250, 0.0
        %300 = vst.msk [vmem:[#allocation2 + $0x188] sm:$0xff] %vm250, 0.0
        %301 = vst.msk [vmem:[#allocation2 + $0x190] sm:$0xff] %vm250, 0.0
        %302 = vst.msk [vmem:[#allocation2 + $0x198] sm:$0xff] %vm250, 0.0
        %303 = vst.msk [vmem:[#allocation2 + $0x1a0] sm:$0xff] %vm250, 0.0
        %304 = vst.msk [vmem:[#allocation2 + $0x1a8] sm:$0xff] %vm250, 0.0
        %305 = vst.msk [vmem:[#allocation2 + $0x1b0] sm:$0xff] %vm250, 0.0
        %306 = vst.msk [vmem:[#allocation2 + $0x1b8] sm:$0xff] %vm250, 0.0
        %307 = vst.msk [vmem:[#allocation2 + $0x1c0] sm:$0xff] %vm250, 0.0
        %308 = vst.msk [vmem:[#allocation2 + $0x1c8] sm:$0xff] %vm250, 0.0
        %309 = vst.msk [vmem:[#allocation2 + $0x1d0] sm:$0xff] %vm250, 0.0
        %310 = vst.msk [vmem:[#allocation2 + $0x1d8] sm:$0xff] %vm250, 0.0
        %311 = vst.msk [vmem:[#allocation2 + $0x1e0] sm:$0xff] %vm250, 0.0
        %312 = vst.msk [vmem:[#allocation2 + $0x1e8] sm:$0xff] %vm250, 0.0
        %313 = vst.msk [vmem:[#allocation2 + $0x1f0] sm:$0xff] %vm250, 0.0
        %314 = vst.msk [vmem:[#allocation2 + $0x1f8] sm:$0xff] %vm250, 0.0
        %315 = vst.msk [vmem:[#allocation2 + $0x200] sm:$0xff] %vm250, 0.0
        %316 = vst.msk [vmem:[#allocation2 + $0x208] sm:$0xff] %vm250, 0.0
        %317 = vst.msk [vmem:[#allocation2 + $0x210] sm:$0xff] %vm250, 0.0
        %318 = vst.msk [vmem:[#allocation2 + $0x218] sm:$0xff] %vm250, 0.0
        %319 = vst.msk [vmem:[#allocation2 + $0x220] sm:$0xff] %vm250, 0.0
        %320 = vst.msk [vmem:[#allocation2 + $0x228] sm:$0xff] %vm250, 0.0
        %321 = vst.msk [vmem:[#allocation2 + $0x230] sm:$0xff] %vm250, 0.0
        %322 = vst.msk [vmem:[#allocation2 + $0x238] sm:$0xff] %vm250, 0.0
      $region44: #{tpu_custom_call.1} parent=39 // pred_fallthru
        _
      %v323 = vld [vmem:[%s241] sm:$0x7]
      %v324 = vld [vmem:[%s1] sm:$0xff]
      %v325 = vld [vmem:[%s1 + $0x8] sm:$0xff]
      %v326 = vld [vmem:[%s1 + $0x10] sm:$0xff]
      %v327 = vld [vmem:[%s1 + $0x18] sm:$0xff]
      %v328 = vld [vmem:[%s1 + $0x20] sm:$0xff]
      %v329 = vld [vmem:[%s1 + $0x28] sm:$0xff]
      %v330 = vld [vmem:[%s1 + $0x30] sm:$0xff]
      %v331 = vld [vmem:[%s1 + $0x38] sm:$0xff]
      %v332 = vld [vmem:[%s1 + $0x40] sm:$0xff]
      %v333 = vld [vmem:[%s1 + $0x48] sm:$0xff]
      %v334 = vld [vmem:[%s1 + $0x50] sm:$0xff]
      %v335 = vld [vmem:[%s1 + $0x58] sm:$0xff]
      %v336 = vld [vmem:[%s1 + $0x60] sm:$0xff]
      %v337 = vld [vmem:[%s1 + $0x68] sm:$0xff]
      %v338 = vld [vmem:[%s1 + $0x70] sm:$0xff]
      %v339 = vld [vmem:[%s1 + $0x78] sm:$0xff]
      %v340 = vld [vmem:[%s1 + $0x80] sm:$0xff]
      %v341 = vld [vmem:[%s1 + $0x88] sm:$0xff]
      %v342 = vld [vmem:[%s1 + $0x90] sm:$0xff]
      %v343 = vld [vmem:[%s1 + $0x98] sm:$0xff]
      %v344 = vld [vmem:[%s1 + $0xa0] sm:$0xff]
      %v345 = vld [vmem:[%s1 + $0xa8] sm:$0xff]
      %v346 = vld [vmem:[%s1 + $0xb0] sm:$0xff]
      %v347 = vld [vmem:[%s1 + $0xb8] sm:$0xff]
      %v348 = vld [vmem:[%s1 + $0xc0] sm:$0xff]
      %v349 = vld [vmem:[%s1 + $0xc8] sm:$0xff]
      %v350 = vld [vmem:[%s1 + $0xd0] sm:$0xff]
      %v351 = vld [vmem:[%s1 + $0xd8] sm:$0xff]
      %v352 = vld [vmem:[%s1 + $0xe0] sm:$0xff]
      %v353 = vld [vmem:[%s1 + $0xe8] sm:$0xff]
      %v354 = vld [vmem:[%s1 + $0xf0] sm:$0xff]
      %v355 = vld [vmem:[%s1 + $0xf8] sm:$0xff]
      %v356 = vld [vmem:[%s1 + $0x100] sm:$0xff]
      %v357 = vld [vmem:[%s1 + $0x108] sm:$0xff]
      %v358 = vld [vmem:[%s1 + $0x110] sm:$0xff]
      %v359 = vld [vmem:[%s1 + $0x118] sm:$0xff]
      %v360 = vld [vmem:[%s1 + $0x120] sm:$0xff]
      %v361 = vld [vmem:[%s1 + $0x128] sm:$0xff]
      %v362 = vld [vmem:[%s1 + $0x130] sm:$0xff]
      %v363 = vld [vmem:[%s1 + $0x138] sm:$0xff]
      %v364 = vld [vmem:[%s1 + $0x140] sm:$0xff]
      %v365 = vld [vmem:[%s1 + $0x148] sm:$0xff]
      %v366 = vld [vmem:[%s1 + $0x150] sm:$0xff]
      %v367 = vld [vmem:[%s1 + $0x158] sm:$0xff]
      %v368 = vld [vmem:[%s1 + $0x160] sm:$0xff]
      %v369 = vld [vmem:[%s1 + $0x168] sm:$0xff]
      %v370 = vld [vmem:[%s1 + $0x170] sm:$0xff]
      %v371 = vld [vmem:[%s1 + $0x178] sm:$0xff]
      %v372 = vld [vmem:[%s1 + $0x180] sm:$0xff]
      %v373 = vld [vmem:[%s1 + $0x188] sm:$0xff]
      %v374 = vld [vmem:[%s1 + $0x190] sm:$0xff]
      %v375 = vld [vmem:[%s1 + $0x198] sm:$0xff]
      %v376 = vld [vmem:[%s1 + $0x1a0] sm:$0xff]
      %v377 = vld [vmem:[%s1 + $0x1a8] sm:$0xff]
      %v378 = vld [vmem:[%s1 + $0x1b0] sm:$0xff]
      %v379 = vld [vmem:[%s1 + $0x1b8] sm:$0xff]
      %v380 = vld [vmem:[%s1 + $0x1c0] sm:$0xff]
      %v381 = vld [vmem:[%s1 + $0x1c8] sm:$0xff]
      %v382 = vld [vmem:[%s1 + $0x1d0] sm:$0xff]
      %v383 = vld [vmem:[%s1 + $0x1d8] sm:$0xff]
      %v384 = vld [vmem:[%s1 + $0x1e0] sm:$0xff]
      %v385 = vld [vmem:[%s1 + $0x1e8] sm:$0xff]
      %v386 = vld [vmem:[%s1 + $0x1f0] sm:$0xff]
      %v387 = vld [vmem:[%s1 + $0x1f8] sm:$0xff]
      %v388 = vld [vmem:[%s1 + $0x200] sm:$0xff]
      %v389 = vld [vmem:[%s1 + $0x208] sm:$0xff]
      %v390 = vld [vmem:[%s1 + $0x210] sm:$0xff]
      %v391 = vld [vmem:[%s1 + $0x218] sm:$0xff]
      %v392 = vld [vmem:[%s1 + $0x220] sm:$0xff]
      %v393 = vld [vmem:[%s1 + $0x228] sm:$0xff]
      %v394 = vld [vmem:[%s1 + $0x230] sm:$0xff]
      %v395 = vld [vmem:[%s1 + $0x238] sm:$0xff]
      %v396 = vld [vmem:[%s2] sm:$0xff]
      %v397 = vld [vmem:[%s2 + $0x8] sm:$0xff]
      %v398 = vld [vmem:[%s2 + $0x10] sm:$0xff]
      %v399 = vld [vmem:[%s2 + $0x18] sm:$0xff]
      %v400 = vld [vmem:[%s2 + $0x20] sm:$0xff]
      %v401 = vld [vmem:[%s2 + $0x28] sm:$0xff]
      %v402 = vld [vmem:[%s2 + $0x30] sm:$0xff]
      %v403 = vld [vmem:[%s2 + $0x38] sm:$0xff]
      %v404 = vld [vmem:[%s2 + $0x40] sm:$0xff]
      %v405 = vld [vmem:[%s2 + $0x48] sm:$0xff]
      %v406 = vld [vmem:[%s2 + $0x50] sm:$0xff]
      %v407 = vld [vmem:[%s2 + $0x58] sm:$0xff]
      %v408 = vld [vmem:[%s2 + $0x60] sm:$0xff]
      %v409 = vld [vmem:[%s2 + $0x68] sm:$0xff]
      %v410 = vld [vmem:[%s2 + $0x70] sm:$0xff]
      %v411 = vld [vmem:[%s2 + $0x78] sm:$0xff]
      %v412 = vld [vmem:[%s2 + $0x80] sm:$0xff]
      %v413 = vld [vmem:[%s2 + $0x88] sm:$0xff]
      %v414 = vld [vmem:[%s2 + $0x90] sm:$0xff]
      %v415 = vld [vmem:[%s2 + $0x98] sm:$0xff]
      %v416 = vld [vmem:[%s2 + $0xa0] sm:$0xff]
      %v417 = vld [vmem:[%s2 + $0xa8] sm:$0xff]
      %v418 = vld [vmem:[%s2 + $0xb0] sm:$0xff]
      %v419 = vld [vmem:[%s2 + $0xb8] sm:$0xff]
      %v420 = vld [vmem:[%s2 + $0xc0] sm:$0xff]
      %v421 = vld [vmem:[%s2 + $0xc8] sm:$0xff]
      %v422 = vld [vmem:[%s2 + $0xd0] sm:$0xff]
      %v423 = vld [vmem:[%s2 + $0xd8] sm:$0xff]
      %v424 = vld [vmem:[%s2 + $0xe0] sm:$0xff]
      %v425 = vld [vmem:[%s2 + $0xe8] sm:$0xff]
      %v426 = vld [vmem:[%s2 + $0xf0] sm:$0xff]
      %v427 = vld [vmem:[%s2 + $0xf8] sm:$0xff]
      %v428 = vld [vmem:[%s2 + $0x100] sm:$0xff]
      %v429 = vld [vmem:[%s2 + $0x108] sm:$0xff]
      %v430 = vld [vmem:[%s2 + $0x110] sm:$0xff]
      %v431 = vld [vmem:[%s2 + $0x118] sm:$0xff]
      %v432 = vld [vmem:[%s2 + $0x120] sm:$0xff]
      %v433 = vld [vmem:[%s2 + $0x128] sm:$0xff]
      %v434 = vld [vmem:[%s2 + $0x130] sm:$0xff]
      %v435 = vld [vmem:[%s2 + $0x138] sm:$0xff]
      %v436 = vld [vmem:[%s2 + $0x140] sm:$0xff]
      %v437 = vld [vmem:[%s2 + $0x148] sm:$0xff]
      %v438 = vld [vmem:[%s2 + $0x150] sm:$0xff]
      %v439 = vld [vmem:[%s2 + $0x158] sm:$0xff]
      %v440 = vld [vmem:[%s2 + $0x160] sm:$0xff]
      %v441 = vld [vmem:[%s2 + $0x168] sm:$0xff]
      %v442 = vld [vmem:[%s2 + $0x170] sm:$0xff]
      %v443 = vld [vmem:[%s2 + $0x178] sm:$0xff]
      %v444 = vld [vmem:[%s2 + $0x180] sm:$0xff]
      %v445 = vld [vmem:[%s2 + $0x188] sm:$0xff]
      %v446 = vld [vmem:[%s2 + $0x190] sm:$0xff]
      %v447 = vld [vmem:[%s2 + $0x198] sm:$0xff]
      %v448 = vld [vmem:[%s2 + $0x1a0] sm:$0xff]
      %v449 = vld [vmem:[%s2 + $0x1a8] sm:$0xff]
      %v450 = vld [vmem:[%s2 + $0x1b0] sm:$0xff]
      %v451 = vld [vmem:[%s2 + $0x1b8] sm:$0xff]
      %v452 = vld [vmem:[%s2 + $0x1c0] sm:$0xff]
      %v453 = vld [vmem:[%s2 + $0x1c8] sm:$0xff]
      %v454 = vld [vmem:[%s2 + $0x1d0] sm:$0xff]
      %v455 = vld [vmem:[%s2 + $0x1d8] sm:$0xff]
      %v456 = vld [vmem:[%s2 + $0x1e0] sm:$0xff]
      %v457 = vld [vmem:[%s2 + $0x1e8] sm:$0xff]
      %v458 = vld [vmem:[%s2 + $0x1f0] sm:$0xff]
      %v459 = vld [vmem:[%s2 + $0x1f8] sm:$0xff]
      %v460 = vld [vmem:[%s2 + $0x200] sm:$0xff]
      %v461 = vld [vmem:[%s2 + $0x208] sm:$0xff]
      %v462 = vld [vmem:[%s2 + $0x210] sm:$0xff]
      %v463 = vld [vmem:[%s2 + $0x218] sm:$0xff]
      %v464 = vld [vmem:[%s2 + $0x220] sm:$0xff]
      %v465 = vld [vmem:[%s2 + $0x228] sm:$0xff]
      %v466 = vld [vmem:[%s2 + $0x230] sm:$0xff]
      %v467 = vld [vmem:[%s2 + $0x238] sm:$0xff]
      %469 = vset.pattern.permute.xlu0 0
      %470 = vperm.xlu0 %469, %v396
      %v471 = vpop.permute.xlu0 %470
      %474 = vset.pattern.permute.xlu0 0
      %475 = vperm.xlu0 %474, %v397
      %v476 = vpop.permute.xlu0 %475
      %479 = vset.pattern.permute.xlu0 0
      %480 = vperm.xlu0 %479, %v398
      %v481 = vpop.permute.xlu0 %480
      %484 = vset.pattern.permute.xlu0 0
      %485 = vperm.xlu0 %484, %v399
      %v486 = vpop.permute.xlu0 %485
      %489 = vset.pattern.permute.xlu0 0
      %490 = vperm.xlu0 %489, %v400
      %v491 = vpop.permute.xlu0 %490
      %494 = vset.pattern.permute.xlu0 0
      %495 = vperm.xlu0 %494, %v401
      %v496 = vpop.permute.xlu0 %495
      %499 = vset.pattern.permute.xlu0 0
      %500 = vperm.xlu0 %499, %v402
      %v501 = vpop.permute.xlu0 %500
      %504 = vset.pattern.permute.xlu0 0
      %505 = vperm.xlu0 %504, %v403
      %v506 = vpop.permute.xlu0 %505
      %509 = vset.pattern.permute.xlu0 0
      %510 = vperm.xlu0 %509, %v404
      %v511 = vpop.permute.xlu0 %510
      %514 = vset.pattern.permute.xlu0 0
      %515 = vperm.xlu0 %514, %v405
      %v516 = vpop.permute.xlu0 %515
      %519 = vset.pattern.permute.xlu0 0
      %520 = vperm.xlu0 %519, %v406
      %v521 = vpop.permute.xlu0 %520
      %524 = vset.pattern.permute.xlu0 0
      %525 = vperm.xlu0 %524, %v407
      %v526 = vpop.permute.xlu0 %525
      %529 = vset.pattern.permute.xlu0 0
      %530 = vperm.xlu0 %529, %v408
      %v531 = vpop.permute.xlu0 %530
      %534 = vset.pattern.permute.xlu0 0
      %535 = vperm.xlu0 %534, %v409
      %v536 = vpop.permute.xlu0 %535
      %539 = vset.pattern.permute.xlu0 0
      %540 = vperm.xlu0 %539, %v410
      %v541 = vpop.permute.xlu0 %540
      %544 = vset.pattern.permute.xlu0 0
      %545 = vperm.xlu0 %544, %v411
      %v546 = vpop.permute.xlu0 %545
      %549 = vset.pattern.permute.xlu0 0
      %550 = vperm.xlu0 %549, %v412
      %v551 = vpop.permute.xlu0 %550
      %554 = vset.pattern.permute.xlu0 0
      %555 = vperm.xlu0 %554, %v413
      %v556 = vpop.permute.xlu0 %555
      %559 = vset.pattern.permute.xlu0 0
      %560 = vperm.xlu0 %559, %v414
      %v561 = vpop.permute.xlu0 %560
      %564 = vset.pattern.permute.xlu0 0
      %565 = vperm.xlu0 %564, %v415
      %v566 = vpop.permute.xlu0 %565
      %569 = vset.pattern.permute.xlu0 0
      %570 = vperm.xlu0 %569, %v416
      %v571 = vpop.permute.xlu0 %570
      %574 = vset.pattern.permute.xlu0 0
      %575 = vperm.xlu0 %574, %v417
      %v576 = vpop.permute.xlu0 %575
      %579 = vset.pattern.permute.xlu0 0
      %580 = vperm.xlu0 %579, %v418
      %v581 = vpop.permute.xlu0 %580
      %584 = vset.pattern.permute.xlu0 0
      %585 = vperm.xlu0 %584, %v419
      %v586 = vpop.permute.xlu0 %585
      %589 = vset.pattern.permute.xlu0 0
      %590 = vperm.xlu0 %589, %v420
      %v591 = vpop.permute.xlu0 %590
      %594 = vset.pattern.permute.xlu0 0
      %595 = vperm.xlu0 %594, %v421
      %v596 = vpop.permute.xlu0 %595
      %599 = vset.pattern.permute.xlu0 0
      %600 = vperm.xlu0 %599, %v422
      %v601 = vpop.permute.xlu0 %600
      %604 = vset.pattern.permute.xlu0 0
      %605 = vperm.xlu0 %604, %v423
      %v606 = vpop.permute.xlu0 %605
      %609 = vset.pattern.permute.xlu0 0
      %610 = vperm.xlu0 %609, %v424
      %v611 = vpop.permute.xlu0 %610
      %614 = vset.pattern.permute.xlu0 0
      %615 = vperm.xlu0 %614, %v425
      %v616 = vpop.permute.xlu0 %615
      %619 = vset.pattern.permute.xlu0 0
      %620 = vperm.xlu0 %619, %v426
      %v621 = vpop.permute.xlu0 %620
      %624 = vset.pattern.permute.xlu0 0
      %625 = vperm.xlu0 %624, %v427
      %v626 = vpop.permute.xlu0 %625
      %629 = vset.pattern.permute.xlu0 0
      %630 = vperm.xlu0 %629, %v428
      %v631 = vpop.permute.xlu0 %630
      %634 = vset.pattern.permute.xlu0 0
      %635 = vperm.xlu0 %634, %v429
      %v636 = vpop.permute.xlu0 %635
      %639 = vset.pattern.permute.xlu0 0
      %640 = vperm.xlu0 %639, %v430
      %v641 = vpop.permute.xlu0 %640
      %644 = vset.pattern.permute.xlu0 0
      %645 = vperm.xlu0 %644, %v431
      %v646 = vpop.permute.xlu0 %645
      %649 = vset.pattern.permute.xlu0 0
      %650 = vperm.xlu0 %649, %v432
      %v651 = vpop.permute.xlu0 %650
      %654 = vset.pattern.permute.xlu0 0
      %655 = vperm.xlu0 %654, %v433
      %v656 = vpop.permute.xlu0 %655
      %659 = vset.pattern.permute.xlu0 0
      %660 = vperm.xlu0 %659, %v434
      %v661 = vpop.permute.xlu0 %660
      %664 = vset.pattern.permute.xlu0 0
      %665 = vperm.xlu0 %664, %v435
      %v666 = vpop.permute.xlu0 %665
      %669 = vset.pattern.permute.xlu0 0
      %670 = vperm.xlu0 %669, %v436
      %v671 = vpop.permute.xlu0 %670
      %674 = vset.pattern.permute.xlu0 0
      %675 = vperm.xlu0 %674, %v437
      %v676 = vpop.permute.xlu0 %675
      %679 = vset.pattern.permute.xlu0 0
      %680 = vperm.xlu0 %679, %v438
      %v681 = vpop.permute.xlu0 %680
      %684 = vset.pattern.permute.xlu0 0
      %685 = vperm.xlu0 %684, %v439
      %v686 = vpop.permute.xlu0 %685
      %689 = vset.pattern.permute.xlu0 0
      %690 = vperm.xlu0 %689, %v440
      %v691 = vpop.permute.xlu0 %690
      %694 = vset.pattern.permute.xlu0 0
      %695 = vperm.xlu0 %694, %v441
      %v696 = vpop.permute.xlu0 %695
      %699 = vset.pattern.permute.xlu0 0
      %700 = vperm.xlu0 %699, %v442
      %v701 = vpop.permute.xlu0 %700
      %704 = vset.pattern.permute.xlu0 0
      %705 = vperm.xlu0 %704, %v443
      %v706 = vpop.permute.xlu0 %705
      %709 = vset.pattern.permute.xlu0 0
      %710 = vperm.xlu0 %709, %v444
      %v711 = vpop.permute.xlu0 %710
      %714 = vset.pattern.permute.xlu0 0
      %715 = vperm.xlu0 %714, %v445
      %v716 = vpop.permute.xlu0 %715
      %719 = vset.pattern.permute.xlu0 0
      %720 = vperm.xlu0 %719, %v446
      %v721 = vpop.permute.xlu0 %720
      %724 = vset.pattern.permute.xlu0 0
      %725 = vperm.xlu0 %724, %v447
      %v726 = vpop.permute.xlu0 %725
      %729 = vset.pattern.permute.xlu0 0
      %730 = vperm.xlu0 %729, %v448
      %v731 = vpop.permute.xlu0 %730
      %734 = vset.pattern.permute.xlu0 0
      %735 = vperm.xlu0 %734, %v449
      %v736 = vpop.permute.xlu0 %735
      %739 = vset.pattern.permute.xlu0 0
      %740 = vperm.xlu0 %739, %v450
      %v741 = vpop.permute.xlu0 %740
      %744 = vset.pattern.permute.xlu0 0
      %745 = vperm.xlu0 %744, %v451
      %v746 = vpop.permute.xlu0 %745
      %749 = vset.pattern.permute.xlu0 0
      %750 = vperm.xlu0 %749, %v452
      %v751 = vpop.permute.xlu0 %750
      %754 = vset.pattern.permute.xlu0 0
      %755 = vperm.xlu0 %754, %v453
      %v756 = vpop.permute.xlu0 %755
      %759 = vset.pattern.permute.xlu0 0
      %760 = vperm.xlu0 %759, %v454
      %v761 = vpop.permute.xlu0 %760
      %764 = vset.pattern.permute.xlu0 0
      %765 = vperm.xlu0 %764, %v455
      %v766 = vpop.permute.xlu0 %765
      %769 = vset.pattern.permute.xlu0 0
      %770 = vperm.xlu0 %769, %v456
      %v771 = vpop.permute.xlu0 %770
      %774 = vset.pattern.permute.xlu0 0
      %775 = vperm.xlu0 %774, %v457
      %v776 = vpop.permute.xlu0 %775
      %779 = vset.pattern.permute.xlu0 0
      %780 = vperm.xlu0 %779, %v458
      %v781 = vpop.permute.xlu0 %780
      %784 = vset.pattern.permute.xlu0 0
      %785 = vperm.xlu0 %784, %v459
      %v786 = vpop.permute.xlu0 %785
      %789 = vset.pattern.permute.xlu0 0
      %790 = vperm.xlu0 %789, %v460
      %v791 = vpop.permute.xlu0 %790
      %794 = vset.pattern.permute.xlu0 0
      %795 = vperm.xlu0 %794, %v461
      %v796 = vpop.permute.xlu0 %795
      %799 = vset.pattern.permute.xlu0 0
      %800 = vperm.xlu0 %799, %v462
      %v801 = vpop.permute.xlu0 %800
      %804 = vset.pattern.permute.xlu0 0
      %805 = vperm.xlu0 %804, %v463
      %v806 = vpop.permute.xlu0 %805
      %809 = vset.pattern.permute.xlu0 0
      %810 = vperm.xlu0 %809, %v464
      %v811 = vpop.permute.xlu0 %810
      %814 = vset.pattern.permute.xlu0 0
      %815 = vperm.xlu0 %814, %v465
      %v816 = vpop.permute.xlu0 %815
      %819 = vset.pattern.permute.xlu0 0
      %820 = vperm.xlu0 %819, %v466
      %v821 = vpop.permute.xlu0 %820
      %824 = vset.pattern.permute.xlu0 0
      %825 = vperm.xlu0 %824, %v467
      %v826 = vpop.permute.xlu0 %825
      %vm828 = vcmask 23552
      %v830 = vsel %vm828, %v324, 0
      %v833 = vsel %vm828, %v325, 0
      %v836 = vsel %vm828, %v326, 0
      %v839 = vsel %vm828, %v327, 0
      %v842 = vsel %vm828, %v328, 0
      %v845 = vsel %vm828, %v329, 0
      %v848 = vsel %vm828, %v330, 0
      %v851 = vsel %vm828, %v331, 0
      %v854 = vsel %vm828, %v332, 0
      %v857 = vsel %vm828, %v333, 0
      %v860 = vsel %vm828, %v334, 0
      %v863 = vsel %vm828, %v335, 0
      %v866 = vsel %vm828, %v336, 0
      %v869 = vsel %vm828, %v337, 0
      %v872 = vsel %vm828, %v338, 0
      %v875 = vsel %vm828, %v339, 0
      %v878 = vsel %vm828, %v340, 0
      %v881 = vsel %vm828, %v341, 0
      %v884 = vsel %vm828, %v342, 0
      %v887 = vsel %vm828, %v343, 0
      %v890 = vsel %vm828, %v344, 0
      %v893 = vsel %vm828, %v345, 0
      %v896 = vsel %vm828, %v346, 0
      %v899 = vsel %vm828, %v347, 0
      %v902 = vsel %vm828, %v348, 0
      %v905 = vsel %vm828, %v349, 0
      %v908 = vsel %vm828, %v350, 0
      %v911 = vsel %vm828, %v351, 0
      %v914 = vsel %vm828, %v352, 0
      %v917 = vsel %vm828, %v353, 0
      %v920 = vsel %vm828, %v354, 0
      %v923 = vsel %vm828, %v355, 0
      %v926 = vsel %vm828, %v356, 0
      %v929 = vsel %vm828, %v357, 0
      %v932 = vsel %vm828, %v358, 0
      %v935 = vsel %vm828, %v359, 0
      %v938 = vsel %vm828, %v360, 0
      %v941 = vsel %vm828, %v361, 0
      %v944 = vsel %vm828, %v362, 0
      %v947 = vsel %vm828, %v363, 0
      %v950 = vsel %vm828, %v364, 0
      %v953 = vsel %vm828, %v365, 0
      %v956 = vsel %vm828, %v366, 0
      %v959 = vsel %vm828, %v367, 0
      %v962 = vsel %vm828, %v368, 0
      %v965 = vsel %vm828, %v369, 0
      %v968 = vsel %vm828, %v370, 0
      %v971 = vsel %vm828, %v371, 0
      %v974 = vsel %vm828, %v372, 0
      %v977 = vsel %vm828, %v373, 0
      %v980 = vsel %vm828, %v374, 0
      %v983 = vsel %vm828, %v375, 0
      %v986 = vsel %vm828, %v376, 0
      %v989 = vsel %vm828, %v377, 0
      %v992 = vsel %vm828, %v378, 0
      %v995 = vsel %vm828, %v379, 0
      %v998 = vsel %vm828, %v380, 0
      %v1001 = vsel %vm828, %v381, 0
      %v1004 = vsel %vm828, %v382, 0
      %v1007 = vsel %vm828, %v383, 0
      %v1010 = vsel %vm828, %v384, 0
      %v1013 = vsel %vm828, %v385, 0
      %v1016 = vsel %vm828, %v386, 0
      %v1019 = vsel %vm828, %v387, 0
      %v1022 = vsel %vm828, %v388, 0
      %v1025 = vsel %vm828, %v389, 0
      %v1028 = vsel %vm828, %v390, 0
      %v1031 = vsel %vm828, %v391, 0
      %v1034 = vsel %vm828, %v392, 0
      %v1037 = vsel %vm828, %v393, 0
      %v1040 = vsel %vm828, %v394, 0
      %v1043 = vsel %vm828, %v395, 0
      %vm1045 = vcmask 1042432
      %v1047 = vsel %vm1045, %v323, 0
      %1049 = vmatprep.subr.mxu0 0.0
      %1050 = vmatpush1.msra.mxu0 0.0
      %1051 = vmatprep.subr.mxu0 0.0
      %1052 = vmatpush1.msra.mxu0 0.0
      %1053 = vmatprep.subr.mxu0 0.0
      %1054 = vmatpush1.msra.mxu0 0.0
      %1055 = vmatprep.subr.mxu0 0.0
      %1056 = vmatpush1.msra.mxu0 0.0
      %1057 = vmatprep.subr.mxu0 0.0
      %1058 = vmatpush1.msra.mxu0 0.0
      %1059 = vmatprep.subr.mxu0 0.0
      %1060 = vmatpush1.msra.mxu0 0.0
      %1061 = vmatprep.subr.mxu0 0.0
      %1062 = vmatpush1.msra.mxu0 0.0
      %1063 = vmatprep.subr.mxu0 0.0
      %1064 = vmatpush1.msra.mxu0 0.0
      %1065 = vmatprep.subr.mxu0 0.0
      %1066 = vmatpush1.msra.mxu0 0.0
      %1067 = vmatprep.subr.mxu0 0.0
      %1068 = vmatpush1.msra.mxu0 0.0
      %1069 = vmatprep.subr.mxu0 0.0
      %1070 = vmatpush1.msra.mxu0 0.0
      %1071 = vmatprep.subr.mxu0 0.0
      %1072 = vmatpush1.msra.mxu0 0.0
      %1073 = vmatprep.subr.mxu0 0.0
      %1074 = vmatpush1.msra.mxu0 0.0
      %1075 = vmatprep.subr.mxu0 0.0
      %1076 = vmatpush1.msra.mxu0 0.0
      %1077 = vmatprep.subr.mxu0 0.0
      %1078 = vmatpush1.msra.mxu0 0.0
      %1079 = vmatprep.subr.mxu0 0.0
      %1080 = vmatpush1.msra.mxu0 %v1047
      %1081 = vmatprep.subr.mxu0 0.0
      %1082 = vmatpush2.msra.mxu0 0.0
      %1083 = vmatprep.subr.mxu0 0.0
      %1084 = vmatpush2.msra.mxu0 0.0
      %1085 = vmatprep.subr.mxu0 0.0
      %1086 = vmatpush2.msra.mxu0 0.0
      %1087 = vmatprep.subr.mxu0 0.0
      %1088 = vmatpush2.msra.mxu0 0.0
      %1089 = vmatprep.subr.mxu0 0.0
      %1090 = vmatpush2.msra.mxu0 0.0
      %1091 = vmatprep.subr.mxu0 0.0
      %1092 = vmatpush2.msra.mxu0 0.0
      %1093 = vmatprep.subr.mxu0 0.0
      %1094 = vmatpush2.msra.mxu0 0.0
      %1095 = vmatprep.subr.mxu0 0.0
      %1096 = vmatpush2.msra.mxu0 0.0
      %1097 = vmatprep.subr.mxu0 0.0
      %1098 = vmatpush2.msra.mxu0 0.0
      %1099 = vmatprep.subr.mxu0 0.0
      %1100 = vmatpush2.msra.mxu0 0.0
      %1101 = vmatprep.subr.mxu0 0.0
      %1102 = vmatpush2.msra.mxu0 0.0
      %1103 = vmatprep.subr.mxu0 0.0
      %1104 = vmatpush2.msra.mxu0 0.0
      %1105 = vmatprep.subr.mxu0 0.0
      %1106 = vmatpush2.msra.mxu0 0.0
      %1107 = vmatprep.subr.mxu0 0.0
      %1108 = vmatpush2.msra.mxu0 0.0
      %1109 = vmatprep.subr.mxu0 0.0
      %1110 = vmatpush2.msra.mxu0 0.0
      %1111 = vmatprep.subr.mxu0 0.0
      %1112 = vmatpush2.msra.mxu0 0.0
      %1113 = vmatprep.mubr.f32.mxu0 0.0
      %1114 = vmatmul.mubr.f32.gmra.mxu0 %v830
      %v1115 = vpop.f32.mrf.mxu0
      %v1116 = vadd.f32 %v471, %v1115
      %v1117 = vpop.f32.mrf.mxu0
      %1118 = vmatprep.mubr.f32.mxu0 0.0
      %1119 = vmatmul.mubr.f32.gmra.mxu0 %v833
      %v1120 = vpop.f32.mrf.mxu0
      %v1121 = vadd.f32 %v476, %v1120
      %v1122 = vpop.f32.mrf.mxu0
      %1123 = vmatprep.mubr.f32.mxu0 0.0
      %1124 = vmatmul.mubr.f32.gmra.mxu0 %v836
      %v1125 = vpop.f32.mrf.mxu0
      %v1126 = vadd.f32 %v481, %v1125
      %v1127 = vpop.f32.mrf.mxu0
      %1128 = vmatprep.mubr.f32.mxu0 0.0
      %1129 = vmatmul.mubr.f32.gmra.mxu0 %v839
      %v1130 = vpop.f32.mrf.mxu0
      %v1131 = vadd.f32 %v486, %v1130
      %v1132 = vpop.f32.mrf.mxu0
      %1133 = vmatprep.mubr.f32.mxu0 0.0
      %1134 = vmatmul.mubr.f32.gmra.mxu0 %v842
      %v1135 = vpop.f32.mrf.mxu0
      %v1136 = vadd.f32 %v491, %v1135
      %v1137 = vpop.f32.mrf.mxu0
      %1138 = vmatprep.mubr.f32.mxu0 0.0
      %1139 = vmatmul.mubr.f32.gmra.mxu0 %v845
      %v1140 = vpop.f32.mrf.mxu0
      %v1141 = vadd.f32 %v496, %v1140
      %v1142 = vpop.f32.mrf.mxu0
      %1143 = vmatprep.mubr.f32.mxu0 0.0
      %1144 = vmatmul.mubr.f32.gmra.mxu0 %v848
      %v1145 = vpop.f32.mrf.mxu0
      %v1146 = vadd.f32 %v501, %v1145
      %v1147 = vpop.f32.mrf.mxu0
      %1148 = vmatprep.mubr.f32.mxu0 0.0
      %1149 = vmatmul.mubr.f32.gmra.mxu0 %v851
      %v1150 = vpop.f32.mrf.mxu0
      %v1151 = vadd.f32 %v506, %v1150
      %v1152 = vpop.f32.mrf.mxu0
      %1153 = vmatprep.mubr.f32.mxu0 0.0
      %1154 = vmatmul.mubr.f32.gmra.mxu0 %v854
      %v1155 = vpop.f32.mrf.mxu0
      %v1156 = vadd.f32 %v511, %v1155
      %v1157 = vpop.f32.mrf.mxu0
      %1158 = vmatprep.mubr.f32.mxu0 0.0
      %1159 = vmatmul.mubr.f32.gmra.mxu0 %v857
      %v1160 = vpop.f32.mrf.mxu0
      %v1161 = vadd.f32 %v516, %v1160
      %v1162 = vpop.f32.mrf.mxu0
      %1163 = vmatprep.mubr.f32.mxu0 0.0
      %1164 = vmatmul.mubr.f32.gmra.mxu0 %v860
      %v1165 = vpop.f32.mrf.mxu0
      %v1166 = vadd.f32 %v521, %v1165
      %v1167 = vpop.f32.mrf.mxu0
      %1168 = vmatprep.mubr.f32.mxu0 0.0
      %1169 = vmatmul.mubr.f32.gmra.mxu0 %v863
      %v1170 = vpop.f32.mrf.mxu0
      %v1171 = vadd.f32 %v526, %v1170
      %v1172 = vpop.f32.mrf.mxu0
      %1173 = vmatprep.mubr.f32.mxu0 0.0
      %1174 = vmatmul.mubr.f32.gmra.mxu0 %v866
      %v1175 = vpop.f32.mrf.mxu0
      %v1176 = vadd.f32 %v531, %v1175
      %v1177 = vpop.f32.mrf.mxu0
      %1178 = vmatprep.mubr.f32.mxu0 0.0
      %1179 = vmatmul.mubr.f32.gmra.mxu0 %v869
      %v1180 = vpop.f32.mrf.mxu0
      %v1181 = vadd.f32 %v536, %v1180
      %v1182 = vpop.f32.mrf.mxu0
      %1183 = vmatprep.mubr.f32.mxu0 0.0
      %1184 = vmatmul.mubr.f32.gmra.mxu0 %v872
      %v1185 = vpop.f32.mrf.mxu0
      %v1186 = vadd.f32 %v541, %v1185
      %v1187 = vpop.f32.mrf.mxu0
      %1188 = vmatprep.mubr.f32.mxu0 0.0
      %1189 = vmatmul.mubr.f32.gmra.mxu0 %v875
      %v1190 = vpop.f32.mrf.mxu0
      %v1191 = vadd.f32 %v546, %v1190
      %v1192 = vpop.f32.mrf.mxu0
      %1193 = vmatprep.mubr.f32.mxu0 0.0
      %1194 = vmatmul.mubr.f32.gmra.mxu0 %v878
      %v1195 = vpop.f32.mrf.mxu0
      %v1196 = vadd.f32 %v551, %v1195
      %v1197 = vpop.f32.mrf.mxu0
      %1198 = vmatprep.mubr.f32.mxu0 0.0
      %1199 = vmatmul.mubr.f32.gmra.mxu0 %v881
      %v1200 = vpop.f32.mrf.mxu0
      %v1201 = vadd.f32 %v556, %v1200
      %v1202 = vpop.f32.mrf.mxu0
      %1203 = vmatprep.mubr.f32.mxu0 0.0
      %1204 = vmatmul.mubr.f32.gmra.mxu0 %v884
      %v1205 = vpop.f32.mrf.mxu0
      %v1206 = vadd.f32 %v561, %v1205
      %v1207 = vpop.f32.mrf.mxu0
      %1208 = vmatprep.mubr.f32.mxu0 0.0
      %1209 = vmatmul.mubr.f32.gmra.mxu0 %v887
      %v1210 = vpop.f32.mrf.mxu0
      %v1211 = vadd.f32 %v566, %v1210
      %v1212 = vpop.f32.mrf.mxu0
      %1213 = vmatprep.mubr.f32.mxu0 0.0
      %1214 = vmatmul.mubr.f32.gmra.mxu0 %v890
      %v1215 = vpop.f32.mrf.mxu0
      %v1216 = vadd.f32 %v571, %v1215
      %v1217 = vpop.f32.mrf.mxu0
      %1218 = vmatprep.mubr.f32.mxu0 0.0
      %1219 = vmatmul.mubr.f32.gmra.mxu0 %v893
      %v1220 = vpop.f32.mrf.mxu0
      %v1221 = vadd.f32 %v576, %v1220
      %v1222 = vpop.f32.mrf.mxu0
      %1223 = vmatprep.mubr.f32.mxu0 0.0
      %1224 = vmatmul.mubr.f32.gmra.mxu0 %v896
      %v1225 = vpop.f32.mrf.mxu0
      %v1226 = vadd.f32 %v581, %v1225
      %v1227 = vpop.f32.mrf.mxu0
      %1228 = vmatprep.mubr.f32.mxu0 0.0
      %1229 = vmatmul.mubr.f32.gmra.mxu0 %v899
      %v1230 = vpop.f32.mrf.mxu0
      %v1231 = vadd.f32 %v586, %v1230
      %v1232 = vpop.f32.mrf.mxu0
      %1233 = vmatprep.mubr.f32.mxu0 0.0
      %1234 = vmatmul.mubr.f32.gmra.mxu0 %v902
      %v1235 = vpop.f32.mrf.mxu0
      %v1236 = vadd.f32 %v591, %v1235
      %v1237 = vpop.f32.mrf.mxu0
      %1238 = vmatprep.mubr.f32.mxu0 0.0
      %1239 = vmatmul.mubr.f32.gmra.mxu0 %v905
      %v1240 = vpop.f32.mrf.mxu0
      %v1241 = vadd.f32 %v596, %v1240
      %v1242 = vpop.f32.mrf.mxu0
      %1243 = vmatprep.mubr.f32.mxu0 0.0
      %1244 = vmatmul.mubr.f32.gmra.mxu0 %v908
      %v1245 = vpop.f32.mrf.mxu0
      %v1246 = vadd.f32 %v601, %v1245
      %v1247 = vpop.f32.mrf.mxu0
      %1248 = vmatprep.mubr.f32.mxu0 0.0
      %1249 = vmatmul.mubr.f32.gmra.mxu0 %v911
      %v1250 = vpop.f32.mrf.mxu0
      %v1251 = vadd.f32 %v606, %v1250
      %v1252 = vpop.f32.mrf.mxu0
      %1253 = vmatprep.mubr.f32.mxu0 0.0
      %1254 = vmatmul.mubr.f32.gmra.mxu0 %v914
      %v1255 = vpop.f32.mrf.mxu0
      %v1256 = vadd.f32 %v611, %v1255
      %v1257 = vpop.f32.mrf.mxu0
      %1258 = vmatprep.mubr.f32.mxu0 0.0
      %1259 = vmatmul.mubr.f32.gmra.mxu0 %v917
      %v1260 = vpop.f32.mrf.mxu0
      %v1261 = vadd.f32 %v616, %v1260
      %v1262 = vpop.f32.mrf.mxu0
      %1263 = vmatprep.mubr.f32.mxu0 0.0
      %1264 = vmatmul.mubr.f32.gmra.mxu0 %v920
      %v1265 = vpop.f32.mrf.mxu0
      %v1266 = vadd.f32 %v621, %v1265
      %v1267 = vpop.f32.mrf.mxu0
      %1268 = vmatprep.mubr.f32.mxu0 0.0
      %1269 = vmatmul.mubr.f32.gmra.mxu0 %v923
      %v1270 = vpop.f32.mrf.mxu0
      %v1271 = vadd.f32 %v626, %v1270
      %v1272 = vpop.f32.mrf.mxu0
      %1273 = vmatprep.mubr.f32.mxu0 0.0
      %1274 = vmatmul.mubr.f32.gmra.mxu0 %v926
      %v1275 = vpop.f32.mrf.mxu0
      %v1276 = vadd.f32 %v631, %v1275
      %v1277 = vpop.f32.mrf.mxu0
      %1278 = vmatprep.mubr.f32.mxu0 0.0
      %1279 = vmatmul.mubr.f32.gmra.mxu0 %v929
      %v1280 = vpop.f32.mrf.mxu0
      %v1281 = vadd.f32 %v636, %v1280
      %v1282 = vpop.f32.mrf.mxu0
      %1283 = vmatprep.mubr.f32.mxu0 0.0
      %1284 = vmatmul.mubr.f32.gmra.mxu0 %v932
      %v1285 = vpop.f32.mrf.mxu0
      %v1286 = vadd.f32 %v641, %v1285
      %v1287 = vpop.f32.mrf.mxu0
      %1288 = vmatprep.mubr.f32.mxu0 0.0
      %1289 = vmatmul.mubr.f32.gmra.mxu0 %v935
      %v1290 = vpop.f32.mrf.mxu0
      %v1291 = vadd.f32 %v646, %v1290
      %v1292 = vpop.f32.mrf.mxu0
      %1293 = vmatprep.mubr.f32.mxu0 0.0
      %1294 = vmatmul.mubr.f32.gmra.mxu0 %v938
      %v1295 = vpop.f32.mrf.mxu0
      %v1296 = vadd.f32 %v651, %v1295
      %v1297 = vpop.f32.mrf.mxu0
      %1298 = vmatprep.mubr.f32.mxu0 0.0
      %1299 = vmatmul.mubr.f32.gmra.mxu0 %v941
      %v1300 = vpop.f32.mrf.mxu0
      %v1301 = vadd.f32 %v656, %v1300
      %v1302 = vpop.f32.mrf.mxu0
      %1303 = vmatprep.mubr.f32.mxu0 0.0
      %1304 = vmatmul.mubr.f32.gmra.mxu0 %v944
      %v1305 = vpop.f32.mrf.mxu0
      %v1306 = vadd.f32 %v661, %v1305
      %v1307 = vpop.f32.mrf.mxu0
      %1308 = vmatprep.mubr.f32.mxu0 0.0
      %1309 = vmatmul.mubr.f32.gmra.mxu0 %v947
      %v1310 = vpop.f32.mrf.mxu0
      %v1311 = vadd.f32 %v666, %v1310
      %v1312 = vpop.f32.mrf.mxu0
      %1313 = vmatprep.mubr.f32.mxu0 0.0
      %1314 = vmatmul.mubr.f32.gmra.mxu0 %v950
      %v1315 = vpop.f32.mrf.mxu0
      %v1316 = vadd.f32 %v671, %v1315
      %v1317 = vpop.f32.mrf.mxu0
      %1318 = vmatprep.mubr.f32.mxu0 0.0
      %1319 = vmatmul.mubr.f32.gmra.mxu0 %v953
      %v1320 = vpop.f32.mrf.mxu0
      %v1321 = vadd.f32 %v676, %v1320
      %v1322 = vpop.f32.mrf.mxu0
      %1323 = vmatprep.mubr.f32.mxu0 0.0
      %1324 = vmatmul.mubr.f32.gmra.mxu0 %v956
      %v1325 = vpop.f32.mrf.mxu0
      %v1326 = vadd.f32 %v681, %v1325
      %v1327 = vpop.f32.mrf.mxu0
      %1328 = vmatprep.mubr.f32.mxu0 0.0
      %1329 = vmatmul.mubr.f32.gmra.mxu0 %v959
      %v1330 = vpop.f32.mrf.mxu0
      %v1331 = vadd.f32 %v686, %v1330
      %v1332 = vpop.f32.mrf.mxu0
      %1333 = vmatprep.mubr.f32.mxu0 0.0
      %1334 = vmatmul.mubr.f32.gmra.mxu0 %v962
      %v1335 = vpop.f32.mrf.mxu0
      %v1336 = vadd.f32 %v691, %v1335
      %v1337 = vpop.f32.mrf.mxu0
      %1338 = vmatprep.mubr.f32.mxu0 0.0
      %1339 = vmatmul.mubr.f32.gmra.mxu0 %v965
      %v1340 = vpop.f32.mrf.mxu0
      %v1341 = vadd.f32 %v696, %v1340
      %v1342 = vpop.f32.mrf.mxu0
      %1343 = vmatprep.mubr.f32.mxu0 0.0
      %1344 = vmatmul.mubr.f32.gmra.mxu0 %v968
      %v1345 = vpop.f32.mrf.mxu0
      %v1346 = vadd.f32 %v701, %v1345
      %v1347 = vpop.f32.mrf.mxu0
      %1348 = vmatprep.mubr.f32.mxu0 0.0
      %1349 = vmatmul.mubr.f32.gmra.mxu0 %v971
      %v1350 = vpop.f32.mrf.mxu0
      %v1351 = vadd.f32 %v706, %v1350
      %v1352 = vpop.f32.mrf.mxu0
      %1353 = vmatprep.mubr.f32.mxu0 0.0
      %1354 = vmatmul.mubr.f32.gmra.mxu0 %v974
      %v1355 = vpop.f32.mrf.mxu0
      %v1356 = vadd.f32 %v711, %v1355
      %v1357 = vpop.f32.mrf.mxu0
      %1358 = vmatprep.mubr.f32.mxu0 0.0
      %1359 = vmatmul.mubr.f32.gmra.mxu0 %v977
      %v1360 = vpop.f32.mrf.mxu0
      %v1361 = vadd.f32 %v716, %v1360
      %v1362 = vpop.f32.mrf.mxu0
      %1363 = vmatprep.mubr.f32.mxu0 0.0
      %1364 = vmatmul.mubr.f32.gmra.mxu0 %v980
      %v1365 = vpop.f32.mrf.mxu0
      %v1366 = vadd.f32 %v721, %v1365
      %v1367 = vpop.f32.mrf.mxu0
      %1368 = vmatprep.mubr.f32.mxu0 0.0
      %1369 = vmatmul.mubr.f32.gmra.mxu0 %v983
      %v1370 = vpop.f32.mrf.mxu0
      %v1371 = vadd.f32 %v726, %v1370
      %v1372 = vpop.f32.mrf.mxu0
      %1373 = vmatprep.mubr.f32.mxu0 0.0
      %1374 = vmatmul.mubr.f32.gmra.mxu0 %v986
      %v1375 = vpop.f32.mrf.mxu0
      %v1376 = vadd.f32 %v731, %v1375
      %v1377 = vpop.f32.mrf.mxu0
      %1378 = vmatprep.mubr.f32.mxu0 0.0
      %1379 = vmatmul.mubr.f32.gmra.mxu0 %v989
      %v1380 = vpop.f32.mrf.mxu0
      %v1381 = vadd.f32 %v736, %v1380
      %v1382 = vpop.f32.mrf.mxu0
      %1383 = vmatprep.mubr.f32.mxu0 0.0
      %1384 = vmatmul.mubr.f32.gmra.mxu0 %v992
      %v1385 = vpop.f32.mrf.mxu0
      %v1386 = vadd.f32 %v741, %v1385
      %v1387 = vpop.f32.mrf.mxu0
      %1388 = vmatprep.mubr.f32.mxu0 0.0
      %1389 = vmatmul.mubr.f32.gmra.mxu0 %v995
      %v1390 = vpop.f32.mrf.mxu0
      %v1391 = vadd.f32 %v746, %v1390
      %v1392 = vpop.f32.mrf.mxu0
      %1393 = vmatprep.mubr.f32.mxu0 0.0
      %1394 = vmatmul.mubr.f32.gmra.mxu0 %v998
      %v1395 = vpop.f32.mrf.mxu0
      %v1396 = vadd.f32 %v751, %v1395
      %v1397 = vpop.f32.mrf.mxu0
      %1398 = vmatprep.mubr.f32.mxu0 0.0
      %1399 = vmatmul.mubr.f32.gmra.mxu0 %v1001
      %v1400 = vpop.f32.mrf.mxu0
      %v1401 = vadd.f32 %v756, %v1400
      %v1402 = vpop.f32.mrf.mxu0
      %1403 = vmatprep.mubr.f32.mxu0 0.0
      %1404 = vmatmul.mubr.f32.gmra.mxu0 %v1004
      %v1405 = vpop.f32.mrf.mxu0
      %v1406 = vadd.f32 %v761, %v1405
      %v1407 = vpop.f32.mrf.mxu0
      %1408 = vmatprep.mubr.f32.mxu0 0.0
      %1409 = vmatmul.mubr.f32.gmra.mxu0 %v1007
      %v1410 = vpop.f32.mrf.mxu0
      %v1411 = vadd.f32 %v766, %v1410
      %v1412 = vpop.f32.mrf.mxu0
      %1413 = vmatprep.mubr.f32.mxu0 0.0
      %1414 = vmatmul.mubr.f32.gmra.mxu0 %v1010
      %v1415 = vpop.f32.mrf.mxu0
      %v1416 = vadd.f32 %v771, %v1415
      %v1417 = vpop.f32.mrf.mxu0
      %1418 = vmatprep.mubr.f32.mxu0 0.0
      %1419 = vmatmul.mubr.f32.gmra.mxu0 %v1013
      %v1420 = vpop.f32.mrf.mxu0
      %v1421 = vadd.f32 %v776, %v1420
      %v1422 = vpop.f32.mrf.mxu0
      %1423 = vmatprep.mubr.f32.mxu0 0.0
      %1424 = vmatmul.mubr.f32.gmra.mxu0 %v1016
      %v1425 = vpop.f32.mrf.mxu0
      %v1426 = vadd.f32 %v781, %v1425
      %v1427 = vpop.f32.mrf.mxu0
      %1428 = vmatprep.mubr.f32.mxu0 0.0
      %1429 = vmatmul.mubr.f32.gmra.mxu0 %v1019
      %v1430 = vpop.f32.mrf.mxu0
      %v1431 = vadd.f32 %v786, %v1430
      %v1432 = vpop.f32.mrf.mxu0
      %1433 = vmatprep.mubr.f32.mxu0 0.0
      %1434 = vmatmul.mubr.f32.gmra.mxu0 %v1022
      %v1435 = vpop.f32.mrf.mxu0
      %v1436 = vadd.f32 %v791, %v1435
      %v1437 = vpop.f32.mrf.mxu0
      %1438 = vmatprep.mubr.f32.mxu0 0.0
      %1439 = vmatmul.mubr.f32.gmra.mxu0 %v1025
      %v1440 = vpop.f32.mrf.mxu0
      %v1441 = vadd.f32 %v796, %v1440
      %v1442 = vpop.f32.mrf.mxu0
      %1443 = vmatprep.mubr.f32.mxu0 0.0
      %1444 = vmatmul.mubr.f32.gmra.mxu0 %v1028
      %v1445 = vpop.f32.mrf.mxu0
      %v1446 = vadd.f32 %v801, %v1445
      %v1447 = vpop.f32.mrf.mxu0
      %1448 = vmatprep.mubr.f32.mxu0 0.0
      %1449 = vmatmul.mubr.f32.gmra.mxu0 %v1031
      %v1450 = vpop.f32.mrf.mxu0
      %v1451 = vadd.f32 %v806, %v1450
      %v1452 = vpop.f32.mrf.mxu0
      %1453 = vmatprep.mubr.f32.mxu0 0.0
      %1454 = vmatmul.mubr.f32.gmra.mxu0 %v1034
      %v1455 = vpop.f32.mrf.mxu0
      %v1456 = vadd.f32 %v811, %v1455
      %v1457 = vpop.f32.mrf.mxu0
      %1458 = vmatprep.mubr.f32.mxu0 0.0
      %1459 = vmatmul.mubr.f32.gmra.mxu0 %v1037
      %v1460 = vpop.f32.mrf.mxu0
      %v1461 = vadd.f32 %v816, %v1460
      %v1462 = vpop.f32.mrf.mxu0
      %1463 = vmatprep.mubr.f32.mxu0 0.0
      %1464 = vmatmul.mubr.f32.gmra.mxu0 %v1040
      %v1465 = vpop.f32.mrf.mxu0
      %v1466 = vadd.f32 %v821, %v1465
      %v1467 = vpop.f32.mrf.mxu0
      %1468 = vmatprep.mubr.f32.mxu0 0.0
      %1469 = vmatmul.mubr.f32.gmra.mxu0 %v1043
      %v1470 = vpop.f32.mrf.mxu0
      %v1471 = vadd.f32 %v826, %v1470
      %v1472 = vpop.f32.mrf.mxu0
      %1473 = vdwg.mxu0
      %v1474 = vmax.f32 %v1116, 0.0
      %v1475 = vmax.f32 %v1121, 0.0
      %v1476 = vmax.f32 %v1126, 0.0
      %v1477 = vmax.f32 %v1131, 0.0
      %v1478 = vmax.f32 %v1136, 0.0
      %v1479 = vmax.f32 %v1141, 0.0
      %v1480 = vmax.f32 %v1146, 0.0
      %v1481 = vmax.f32 %v1151, 0.0
      %v1482 = vmax.f32 %v1156, 0.0
      %v1483 = vmax.f32 %v1161, 0.0
      %v1484 = vmax.f32 %v1166, 0.0
      %v1485 = vmax.f32 %v1171, 0.0
      %v1486 = vmax.f32 %v1176, 0.0
      %v1487 = vmax.f32 %v1181, 0.0
      %v1488 = vmax.f32 %v1186, 0.0
      %v1489 = vmax.f32 %v1191, 0.0
      %v1490 = vmax.f32 %v1196, 0.0
      %v1491 = vmax.f32 %v1201, 0.0
      %v1492 = vmax.f32 %v1206, 0.0
      %v1493 = vmax.f32 %v1211, 0.0
      %v1494 = vmax.f32 %v1216, 0.0
      %v1495 = vmax.f32 %v1221, 0.0
      %v1496 = vmax.f32 %v1226, 0.0
      %v1497 = vmax.f32 %v1231, 0.0
      %v1498 = vmax.f32 %v1236, 0.0
      %v1499 = vmax.f32 %v1241, 0.0
      %v1500 = vmax.f32 %v1246, 0.0
      %v1501 = vmax.f32 %v1251, 0.0
      %v1502 = vmax.f32 %v1256, 0.0
      %v1503 = vmax.f32 %v1261, 0.0
      %v1504 = vmax.f32 %v1266, 0.0
      %v1505 = vmax.f32 %v1271, 0.0
      %v1506 = vmax.f32 %v1276, 0.0
      %v1507 = vmax.f32 %v1281, 0.0
      %v1508 = vmax.f32 %v1286, 0.0
      %v1509 = vmax.f32 %v1291, 0.0
      %v1510 = vmax.f32 %v1296, 0.0
      %v1511 = vmax.f32 %v1301, 0.0
      %v1512 = vmax.f32 %v1306, 0.0
      %v1513 = vmax.f32 %v1311, 0.0
      %v1514 = vmax.f32 %v1316, 0.0
      %v1515 = vmax.f32 %v1321, 0.0
      %v1516 = vmax.f32 %v1326, 0.0
      %v1517 = vmax.f32 %v1331, 0.0
      %v1518 = vmax.f32 %v1336, 0.0
      %v1519 = vmax.f32 %v1341, 0.0
      %v1520 = vmax.f32 %v1346, 0.0
      %v1521 = vmax.f32 %v1351, 0.0
      %v1522 = vmax.f32 %v1356, 0.0
      %v1523 = vmax.f32 %v1361, 0.0
      %v1524 = vmax.f32 %v1366, 0.0
      %v1525 = vmax.f32 %v1371, 0.0
      %v1526 = vmax.f32 %v1376, 0.0
      %v1527 = vmax.f32 %v1381, 0.0
      %v1528 = vmax.f32 %v1386, 0.0
      %v1529 = vmax.f32 %v1391, 0.0
      %v1530 = vmax.f32 %v1396, 0.0
      %v1531 = vmax.f32 %v1401, 0.0
      %v1532 = vmax.f32 %v1406, 0.0
      %v1533 = vmax.f32 %v1411, 0.0
      %v1534 = vmax.f32 %v1416, 0.0
      %v1535 = vmax.f32 %v1421, 0.0
      %v1536 = vmax.f32 %v1426, 0.0
      %v1537 = vmax.f32 %v1431, 0.0
      %v1538 = vmax.f32 %v1436, 0.0
      %v1539 = vmax.f32 %v1441, 0.0
      %v1540 = vmax.f32 %v1446, 0.0
      %v1541 = vmax.f32 %v1451, 0.0
      %v1542 = vmax.f32 %v1456, 0.0
      %v1543 = vmax.f32 %v1461, 0.0
      %v1544 = vmax.f32 %v1466, 0.0
      %v1545 = vmax.f32 %v1471, 0.0
      %v1546 = vld [vmem:[#allocation2] sm:$0xff]
      %v1547 = vld [vmem:[#allocation2 + $0x8] sm:$0xff]
      %v1548 = vld [vmem:[#allocation2 + $0x10] sm:$0xff]
      %v1549 = vld [vmem:[#allocation2 + $0x18] sm:$0xff]
      %v1550 = vld [vmem:[#allocation2 + $0x20] sm:$0xff]
      %v1551 = vld [vmem:[#allocation2 + $0x28] sm:$0xff]
      %v1552 = vld [vmem:[#allocation2 + $0x30] sm:$0xff]
      %v1553 = vld [vmem:[#allocation2 + $0x38] sm:$0xff]
      %v1554 = vld [vmem:[#allocation2 + $0x40] sm:$0xff]
      %v1555 = vld [vmem:[#allocation2 + $0x48] sm:$0xff]
      %v1556 = vld [vmem:[#allocation2 + $0x50] sm:$0xff]
      %v1557 = vld [vmem:[#allocation2 + $0x58] sm:$0xff]
      %v1558 = vld [vmem:[#allocation2 + $0x60] sm:$0xff]
      %v1559 = vld [vmem:[#allocation2 + $0x68] sm:$0xff]
      %v1560 = vld [vmem:[#allocation2 + $0x70] sm:$0xff]
      %v1561 = vld [vmem:[#allocation2 + $0x78] sm:$0xff]
      %v1562 = vld [vmem:[#allocation2 + $0x80] sm:$0xff]
      %v1563 = vld [vmem:[#allocation2 + $0x88] sm:$0xff]
      %v1564 = vld [vmem:[#allocation2 + $0x90] sm:$0xff]
      %v1565 = vld [vmem:[#allocation2 + $0x98] sm:$0xff]
      %v1566 = vld [vmem:[#allocation2 + $0xa0] sm:$0xff]
      %v1567 = vld [vmem:[#allocation2 + $0xa8] sm:$0xff]
      %v1568 = vld [vmem:[#allocation2 + $0xb0] sm:$0xff]
      %v1569 = vld [vmem:[#allocation2 + $0xb8] sm:$0xff]
      %v1570 = vld [vmem:[#allocation2 + $0xc0] sm:$0xff]
      %v1571 = vld [vmem:[#allocation2 + $0xc8] sm:$0xff]
      %v1572 = vld [vmem:[#allocation2 + $0xd0] sm:$0xff]
      %v1573 = vld [vmem:[#allocation2 + $0xd8] sm:$0xff]
      %v1574 = vld [vmem:[#allocation2 + $0xe0] sm:$0xff]
      %v1575 = vld [vmem:[#allocation2 + $0xe8] sm:$0xff]
      %v1576 = vld [vmem:[#allocation2 + $0xf0] sm:$0xff]
      %v1577 = vld [vmem:[#allocation2 + $0xf8] sm:$0xff]
      %v1578 = vld [vmem:[#allocation2 + $0x100] sm:$0xff]
      %v1579 = vld [vmem:[#allocation2 + $0x108] sm:$0xff]
      %v1580 = vld [vmem:[#allocation2 + $0x110] sm:$0xff]
      %v1581 = vld [vmem:[#allocation2 + $0x118] sm:$0xff]
      %v1582 = vld [vmem:[#allocation2 + $0x120] sm:$0xff]
      %v1583 = vld [vmem:[#allocation2 + $0x128] sm:$0xff]
      %v1584 = vld [vmem:[#allocation2 + $0x130] sm:$0xff]
      %v1585 = vld [vmem:[#allocation2 + $0x138] sm:$0xff]
      %v1586 = vld [vmem:[#allocation2 + $0x140] sm:$0xff]
      %v1587 = vld [vmem:[#allocation2 + $0x148] sm:$0xff]
      %v1588 = vld [vmem:[#allocation2 + $0x150] sm:$0xff]
      %v1589 = vld [vmem:[#allocation2 + $0x158] sm:$0xff]
      %v1590 = vld [vmem:[#allocation2 + $0x160] sm:$0xff]
      %v1591 = vld [vmem:[#allocation2 + $0x168] sm:$0xff]
      %v1592 = vld [vmem:[#allocation2 + $0x170] sm:$0xff]
      %v1593 = vld [vmem:[#allocation2 + $0x178] sm:$0xff]
      %v1594 = vld [vmem:[#allocation2 + $0x180] sm:$0xff]
      %v1595 = vld [vmem:[#allocation2 + $0x188] sm:$0xff]
      %v1596 = vld [vmem:[#allocation2 + $0x190] sm:$0xff]
      %v1597 = vld [vmem:[#allocation2 + $0x198] sm:$0xff]
      %v1598 = vld [vmem:[#allocation2 + $0x1a0] sm:$0xff]
      %v1599 = vld [vmem:[#allocation2 + $0x1a8] sm:$0xff]
      %v1600 = vld [vmem:[#allocation2 + $0x1b0] sm:$0xff]
      %v1601 = vld [vmem:[#allocation2 + $0x1b8] sm:$0xff]
      %v1602 = vld [vmem:[#allocation2 + $0x1c0] sm:$0xff]
      %v1603 = vld [vmem:[#allocation2 + $0x1c8] sm:$0xff]
      %v1604 = vld [vmem:[#allocation2 + $0x1d0] sm:$0xff]
      %v1605 = vld [vmem:[#allocation2 + $0x1d8] sm:$0xff]
      %v1606 = vld [vmem:[#allocation2 + $0x1e0] sm:$0xff]
      %v1607 = vld [vmem:[#allocation2 + $0x1e8] sm:$0xff]
      %v1608 = vld [vmem:[#allocation2 + $0x1f0] sm:$0xff]
      %v1609 = vld [vmem:[#allocation2 + $0x1f8] sm:$0xff]
      %v1610 = vld [vmem:[#allocation2 + $0x200] sm:$0xff]
      %v1611 = vld [vmem:[#allocation2 + $0x208] sm:$0xff]
      %v1612 = vld [vmem:[#allocation2 + $0x210] sm:$0xff]
      %v1613 = vld [vmem:[#allocation2 + $0x218] sm:$0xff]
      %v1614 = vld [vmem:[#allocation2 + $0x220] sm:$0xff]
      %v1615 = vld [vmem:[#allocation2 + $0x228] sm:$0xff]
      %v1616 = vld [vmem:[#allocation2 + $0x230] sm:$0xff]
      %v1617 = vld [vmem:[#allocation2 + $0x238] sm:$0xff]
      %1618 = vadd.xlane.f32.xlu0 %v1474
      %v1619 = vpop.xlane.xlu0 %1618
      %1620 = vadd.xlane.f32.xlu0 %v1475
      %v1621 = vpop.xlane.xlu0 %1620
      %1622 = vadd.xlane.f32.xlu0 %v1476
      %v1623 = vpop.xlane.xlu0 %1622
      %1624 = vadd.xlane.f32.xlu0 %v1477
      %v1625 = vpop.xlane.xlu0 %1624
      %1626 = vadd.xlane.f32.xlu0 %v1478
      %v1627 = vpop.xlane.xlu0 %1626
      %1628 = vadd.xlane.f32.xlu0 %v1479
      %v1629 = vpop.xlane.xlu0 %1628
      %1630 = vadd.xlane.f32.xlu0 %v1480
      %v1631 = vpop.xlane.xlu0 %1630
      %1632 = vadd.xlane.f32.xlu0 %v1481
      %v1633 = vpop.xlane.xlu0 %1632
      %1634 = vadd.xlane.f32.xlu0 %v1482
      %v1635 = vpop.xlane.xlu0 %1634
      %1636 = vadd.xlane.f32.xlu0 %v1483
      %v1637 = vpop.xlane.xlu0 %1636
      %1638 = vadd.xlane.f32.xlu0 %v1484
      %v1639 = vpop.xlane.xlu0 %1638
      %1640 = vadd.xlane.f32.xlu0 %v1485
      %v1641 = vpop.xlane.xlu0 %1640
      %1642 = vadd.xlane.f32.xlu0 %v1486
      %v1643 = vpop.xlane.xlu0 %1642
      %1644 = vadd.xlane.f32.xlu0 %v1487
      %v1645 = vpop.xlane.xlu0 %1644
      %1646 = vadd.xlane.f32.xlu0 %v1488
      %v1647 = vpop.xlane.xlu0 %1646
      %1648 = vadd.xlane.f32.xlu0 %v1489
      %v1649 = vpop.xlane.xlu0 %1648
      %1650 = vadd.xlane.f32.xlu0 %v1490
      %v1651 = vpop.xlane.xlu0 %1650
      %1652 = vadd.xlane.f32.xlu0 %v1491
      %v1653 = vpop.xlane.xlu0 %1652
      %1654 = vadd.xlane.f32.xlu0 %v1492
      %v1655 = vpop.xlane.xlu0 %1654
      %1656 = vadd.xlane.f32.xlu0 %v1493
      %v1657 = vpop.xlane.xlu0 %1656
      %1658 = vadd.xlane.f32.xlu0 %v1494
      %v1659 = vpop.xlane.xlu0 %1658
      %1660 = vadd.xlane.f32.xlu0 %v1495
      %v1661 = vpop.xlane.xlu0 %1660
      %1662 = vadd.xlane.f32.xlu0 %v1496
      %v1663 = vpop.xlane.xlu0 %1662
      %1664 = vadd.xlane.f32.xlu0 %v1497
      %v1665 = vpop.xlane.xlu0 %1664
      %1666 = vadd.xlane.f32.xlu0 %v1498
      %v1667 = vpop.xlane.xlu0 %1666
      %1668 = vadd.xlane.f32.xlu0 %v1499
      %v1669 = vpop.xlane.xlu0 %1668
      %1670 = vadd.xlane.f32.xlu0 %v1500
      %v1671 = vpop.xlane.xlu0 %1670
      %1672 = vadd.xlane.f32.xlu0 %v1501
      %v1673 = vpop.xlane.xlu0 %1672
      %1674 = vadd.xlane.f32.xlu0 %v1502
      %v1675 = vpop.xlane.xlu0 %1674
      %1676 = vadd.xlane.f32.xlu0 %v1503
      %v1677 = vpop.xlane.xlu0 %1676
      %1678 = vadd.xlane.f32.xlu0 %v1504
      %v1679 = vpop.xlane.xlu0 %1678
      %1680 = vadd.xlane.f32.xlu0 %v1505
      %v1681 = vpop.xlane.xlu0 %1680
      %1682 = vadd.xlane.f32.xlu0 %v1506
      %v1683 = vpop.xlane.xlu0 %1682
      %1684 = vadd.xlane.f32.xlu0 %v1507
      %v1685 = vpop.xlane.xlu0 %1684
      %1686 = vadd.xlane.f32.xlu0 %v1508
      %v1687 = vpop.xlane.xlu0 %1686
      %1688 = vadd.xlane.f32.xlu0 %v1509
      %v1689 = vpop.xlane.xlu0 %1688
      %1690 = vadd.xlane.f32.xlu0 %v1510
      %v1691 = vpop.xlane.xlu0 %1690
      %1692 = vadd.xlane.f32.xlu0 %v1511
      %v1693 = vpop.xlane.xlu0 %1692
      %1694 = vadd.xlane.f32.xlu0 %v1512
      %v1695 = vpop.xlane.xlu0 %1694
      %1696 = vadd.xlane.f32.xlu0 %v1513
      %v1697 = vpop.xlane.xlu0 %1696
      %1698 = vadd.xlane.f32.xlu0 %v1514
      %v1699 = vpop.xlane.xlu0 %1698
      %1700 = vadd.xlane.f32.xlu0 %v1515
      %v1701 = vpop.xlane.xlu0 %1700
      %1702 = vadd.xlane.f32.xlu0 %v1516
      %v1703 = vpop.xlane.xlu0 %1702
      %1704 = vadd.xlane.f32.xlu0 %v1517
      %v1705 = vpop.xlane.xlu0 %1704
      %1706 = vadd.xlane.f32.xlu0 %v1518
      %v1707 = vpop.xlane.xlu0 %1706
      %1708 = vadd.xlane.f32.xlu0 %v1519
      %v1709 = vpop.xlane.xlu0 %1708
      %1710 = vadd.xlane.f32.xlu0 %v1520
      %v1711 = vpop.xlane.xlu0 %1710
      %1712 = vadd.xlane.f32.xlu0 %v1521
      %v1713 = vpop.xlane.xlu0 %1712
      %1714 = vadd.xlane.f32.xlu0 %v1522
      %v1715 = vpop.xlane.xlu0 %1714
      %1716 = vadd.xlane.f32.xlu0 %v1523
      %v1717 = vpop.xlane.xlu0 %1716
      %1718 = vadd.xlane.f32.xlu0 %v1524
      %v1719 = vpop.xlane.xlu0 %1718
      %1720 = vadd.xlane.f32.xlu0 %v1525
      %v1721 = vpop.xlane.xlu0 %1720
      %1722 = vadd.xlane.f32.xlu0 %v1526
      %v1723 = vpop.xlane.xlu0 %1722
      %1724 = vadd.xlane.f32.xlu0 %v1527
      %v1725 = vpop.xlane.xlu0 %1724
      %1726 = vadd.xlane.f32.xlu0 %v1528
      %v1727 = vpop.xlane.xlu0 %1726
      %1728 = vadd.xlane.f32.xlu0 %v1529
      %v1729 = vpop.xlane.xlu0 %1728
      %1730 = vadd.xlane.f32.xlu0 %v1530
      %v1731 = vpop.xlane.xlu0 %1730
      %1732 = vadd.xlane.f32.xlu0 %v1531
      %v1733 = vpop.xlane.xlu0 %1732
      %1734 = vadd.xlane.f32.xlu0 %v1532
      %v1735 = vpop.xlane.xlu0 %1734
      %1736 = vadd.xlane.f32.xlu0 %v1533
      %v1737 = vpop.xlane.xlu0 %1736
      %1738 = vadd.xlane.f32.xlu0 %v1534
      %v1739 = vpop.xlane.xlu0 %1738
      %1740 = vadd.xlane.f32.xlu0 %v1535
      %v1741 = vpop.xlane.xlu0 %1740
      %1742 = vadd.xlane.f32.xlu0 %v1536
      %v1743 = vpop.xlane.xlu0 %1742
      %1744 = vadd.xlane.f32.xlu0 %v1537
      %v1745 = vpop.xlane.xlu0 %1744
      %1746 = vadd.xlane.f32.xlu0 %v1538
      %v1747 = vpop.xlane.xlu0 %1746
      %1748 = vadd.xlane.f32.xlu0 %v1539
      %v1749 = vpop.xlane.xlu0 %1748
      %1750 = vadd.xlane.f32.xlu0 %v1540
      %v1751 = vpop.xlane.xlu0 %1750
      %1752 = vadd.xlane.f32.xlu0 %v1541
      %v1753 = vpop.xlane.xlu0 %1752
      %1754 = vadd.xlane.f32.xlu0 %v1542
      %v1755 = vpop.xlane.xlu0 %1754
      %1756 = vadd.xlane.f32.xlu0 %v1543
      %v1757 = vpop.xlane.xlu0 %1756
      %1758 = vadd.xlane.f32.xlu0 %v1544
      %v1759 = vpop.xlane.xlu0 %1758
      %1760 = vadd.xlane.f32.xlu0 %v1545
      %v1761 = vpop.xlane.xlu0 %1760
      %v1762 = vadd.f32 %v1546, %v1619
      %v1763 = vadd.f32 %v1547, %v1621
      %v1764 = vadd.f32 %v1548, %v1623
      %v1765 = vadd.f32 %v1549, %v1625
      %v1766 = vadd.f32 %v1550, %v1627
      %v1767 = vadd.f32 %v1551, %v1629
      %v1768 = vadd.f32 %v1552, %v1631
      %v1769 = vadd.f32 %v1553, %v1633
      %v1770 = vadd.f32 %v1554, %v1635
      %v1771 = vadd.f32 %v1555, %v1637
      %v1772 = vadd.f32 %v1556, %v1639
      %v1773 = vadd.f32 %v1557, %v1641
      %v1774 = vadd.f32 %v1558, %v1643
      %v1775 = vadd.f32 %v1559, %v1645
      %v1776 = vadd.f32 %v1560, %v1647
      %v1777 = vadd.f32 %v1561, %v1649
      %v1778 = vadd.f32 %v1562, %v1651
      %v1779 = vadd.f32 %v1563, %v1653
      %v1780 = vadd.f32 %v1564, %v1655
      %v1781 = vadd.f32 %v1565, %v1657
      %v1782 = vadd.f32 %v1566, %v1659
      %v1783 = vadd.f32 %v1567, %v1661
      %v1784 = vadd.f32 %v1568, %v1663
      %v1785 = vadd.f32 %v1569, %v1665
      %v1786 = vadd.f32 %v1570, %v1667
      %v1787 = vadd.f32 %v1571, %v1669
      %v1788 = vadd.f32 %v1572, %v1671
      %v1789 = vadd.f32 %v1573, %v1673
      %v1790 = vadd.f32 %v1574, %v1675
      %v1791 = vadd.f32 %v1575, %v1677
      %v1792 = vadd.f32 %v1576, %v1679
      %v1793 = vadd.f32 %v1577, %v1681
      %v1794 = vadd.f32 %v1578, %v1683
      %v1795 = vadd.f32 %v1579, %v1685
      %v1796 = vadd.f32 %v1580, %v1687
      %v1797 = vadd.f32 %v1581, %v1689
      %v1798 = vadd.f32 %v1582, %v1691
      %v1799 = vadd.f32 %v1583, %v1693
      %v1800 = vadd.f32 %v1584, %v1695
      %v1801 = vadd.f32 %v1585, %v1697
      %v1802 = vadd.f32 %v1586, %v1699
      %v1803 = vadd.f32 %v1587, %v1701
      %v1804 = vadd.f32 %v1588, %v1703
      %v1805 = vadd.f32 %v1589, %v1705
      %v1806 = vadd.f32 %v1590, %v1707
      %v1807 = vadd.f32 %v1591, %v1709
      %v1808 = vadd.f32 %v1592, %v1711
      %v1809 = vadd.f32 %v1593, %v1713
      %v1810 = vadd.f32 %v1594, %v1715
      %v1811 = vadd.f32 %v1595, %v1717
      %v1812 = vadd.f32 %v1596, %v1719
      %v1813 = vadd.f32 %v1597, %v1721
      %v1814 = vadd.f32 %v1598, %v1723
      %v1815 = vadd.f32 %v1599, %v1725
      %v1816 = vadd.f32 %v1600, %v1727
      %v1817 = vadd.f32 %v1601, %v1729
      %v1818 = vadd.f32 %v1602, %v1731
      %v1819 = vadd.f32 %v1603, %v1733
      %v1820 = vadd.f32 %v1604, %v1735
      %v1821 = vadd.f32 %v1605, %v1737
      %v1822 = vadd.f32 %v1606, %v1739
      %v1823 = vadd.f32 %v1607, %v1741
      %v1824 = vadd.f32 %v1608, %v1743
      %v1825 = vadd.f32 %v1609, %v1745
      %v1826 = vadd.f32 %v1610, %v1747
      %v1827 = vadd.f32 %v1611, %v1749
      %v1828 = vadd.f32 %v1612, %v1751
      %v1829 = vadd.f32 %v1613, %v1753
      %v1830 = vadd.f32 %v1614, %v1755
      %v1831 = vadd.f32 %v1615, %v1757
      %v1832 = vadd.f32 %v1616, %v1759
      %v1833 = vadd.f32 %v1617, %v1761
      %vm1834 = vcmask 7168
      %1835 = vst.msk [vmem:[#allocation2] sm:$0xff] %vm1834, %v1762
      %1836 = vst.msk [vmem:[#allocation2 + $0x8] sm:$0xff] %vm1834, %v1763
      %1837 = vst.msk [vmem:[#allocation2 + $0x10] sm:$0xff] %vm1834, %v1764
      %1838 = vst.msk [vmem:[#allocation2 + $0x18] sm:$0xff] %vm1834, %v1765
      %1839 = vst.msk [vmem:[#allocation2 + $0x20] sm:$0xff] %vm1834, %v1766
      %1840 = vst.msk [vmem:[#allocation2 + $0x28] sm:$0xff] %vm1834, %v1767
      %1841 = vst.msk [vmem:[#allocation2 + $0x30] sm:$0xff] %vm1834, %v1768
      %1842 = vst.msk [vmem:[#allocation2 + $0x38] sm:$0xff] %vm1834, %v1769
      %1843 = vst.msk [vmem:[#allocation2 + $0x40] sm:$0xff] %vm1834, %v1770
      %1844 = vst.msk [vmem:[#allocation2 + $0x48] sm:$0xff] %vm1834, %v1771
      %1845 = vst.msk [vmem:[#allocation2 + $0x50] sm:$0xff] %vm1834, %v1772
      %1846 = vst.msk [vmem:[#allocation2 + $0x58] sm:$0xff] %vm1834, %v1773
      %1847 = vst.msk [vmem:[#allocation2 + $0x60] sm:$0xff] %vm1834, %v1774
      %1848 = vst.msk [vmem:[#allocation2 + $0x68] sm:$0xff] %vm1834, %v1775
      %1849 = vst.msk [vmem:[#allocation2 + $0x70] sm:$0xff] %vm1834, %v1776
      %1850 = vst.msk [vmem:[#allocation2 + $0x78] sm:$0xff] %vm1834, %v1777
      %1851 = vst.msk [vmem:[#allocation2 + $0x80] sm:$0xff] %vm1834, %v1778
      %1852 = vst.msk [vmem:[#allocation2 + $0x88] sm:$0xff] %vm1834, %v1779
      %1853 = vst.msk [vmem:[#allocation2 + $0x90] sm:$0xff] %vm1834, %v1780
      %1854 = vst.msk [vmem:[#allocation2 + $0x98] sm:$0xff] %vm1834, %v1781
      %1855 = vst.msk [vmem:[#allocation2 + $0xa0] sm:$0xff] %vm1834, %v1782
      %1856 = vst.msk [vmem:[#allocation2 + $0xa8] sm:$0xff] %vm1834, %v1783
      %1857 = vst.msk [vmem:[#allocation2 + $0xb0] sm:$0xff] %vm1834, %v1784
      %1858 = vst.msk [vmem:[#allocation2 + $0xb8] sm:$0xff] %vm1834, %v1785
      %1859 = vst.msk [vmem:[#allocation2 + $0xc0] sm:$0xff] %vm1834, %v1786
      %1860 = vst.msk [vmem:[#allocation2 + $0xc8] sm:$0xff] %vm1834, %v1787
      %1861 = vst.msk [vmem:[#allocation2 + $0xd0] sm:$0xff] %vm1834, %v1788
      %1862 = vst.msk [vmem:[#allocation2 + $0xd8] sm:$0xff] %vm1834, %v1789
      %1863 = vst.msk [vmem:[#allocation2 + $0xe0] sm:$0xff] %vm1834, %v1790
      %1864 = vst.msk [vmem:[#allocation2 + $0xe8] sm:$0xff] %vm1834, %v1791
      %1865 = vst.msk [vmem:[#allocation2 + $0xf0] sm:$0xff] %vm1834, %v1792
      %1866 = vst.msk [vmem:[#allocation2 + $0xf8] sm:$0xff] %vm1834, %v1793
      %1867 = vst.msk [vmem:[#allocation2 + $0x100] sm:$0xff] %vm1834, %v1794
      %1868 = vst.msk [vmem:[#allocation2 + $0x108] sm:$0xff] %vm1834, %v1795
      %1869 = vst.msk [vmem:[#allocation2 + $0x110] sm:$0xff] %vm1834, %v1796
      %1870 = vst.msk [vmem:[#allocation2 + $0x118] sm:$0xff] %vm1834, %v1797
      %1871 = vst.msk [vmem:[#allocation2 + $0x120] sm:$0xff] %vm1834, %v1798
      %1872 = vst.msk [vmem:[#allocation2 + $0x128] sm:$0xff] %vm1834, %v1799
      %1873 = vst.msk [vmem:[#allocation2 + $0x130] sm:$0xff] %vm1834, %v1800
      %1874 = vst.msk [vmem:[#allocation2 + $0x138] sm:$0xff] %vm1834, %v1801
      %1875 = vst.msk [vmem:[#allocation2 + $0x140] sm:$0xff] %vm1834, %v1802
      %1876 = vst.msk [vmem:[#allocation2 + $0x148] sm:$0xff] %vm1834, %v1803
      %1877 = vst.msk [vmem:[#allocation2 + $0x150] sm:$0xff] %vm1834, %v1804
      %1878 = vst.msk [vmem:[#allocation2 + $0x158] sm:$0xff] %vm1834, %v1805
      %1879 = vst.msk [vmem:[#allocation2 + $0x160] sm:$0xff] %vm1834, %v1806
      %1880 = vst.msk [vmem:[#allocation2 + $0x168] sm:$0xff] %vm1834, %v1807
      %1881 = vst.msk [vmem:[#allocation2 + $0x170] sm:$0xff] %vm1834, %v1808
      %1882 = vst.msk [vmem:[#allocation2 + $0x178] sm:$0xff] %vm1834, %v1809
      %1883 = vst.msk [vmem:[#allocation2 + $0x180] sm:$0xff] %vm1834, %v1810
      %1884 = vst.msk [vmem:[#allocation2 + $0x188] sm:$0xff] %vm1834, %v1811
      %1885 = vst.msk [vmem:[#allocation2 + $0x190] sm:$0xff] %vm1834, %v1812
      %1886 = vst.msk [vmem:[#allocation2 + $0x198] sm:$0xff] %vm1834, %v1813
      %1887 = vst.msk [vmem:[#allocation2 + $0x1a0] sm:$0xff] %vm1834, %v1814
      %1888 = vst.msk [vmem:[#allocation2 + $0x1a8] sm:$0xff] %vm1834, %v1815
      %1889 = vst.msk [vmem:[#allocation2 + $0x1b0] sm:$0xff] %vm1834, %v1816
      %1890 = vst.msk [vmem:[#allocation2 + $0x1b8] sm:$0xff] %vm1834, %v1817
      %1891 = vst.msk [vmem:[#allocation2 + $0x1c0] sm:$0xff] %vm1834, %v1818
      %1892 = vst.msk [vmem:[#allocation2 + $0x1c8] sm:$0xff] %vm1834, %v1819
      %1893 = vst.msk [vmem:[#allocation2 + $0x1d0] sm:$0xff] %vm1834, %v1820
      %1894 = vst.msk [vmem:[#allocation2 + $0x1d8] sm:$0xff] %vm1834, %v1821
      %1895 = vst.msk [vmem:[#allocation2 + $0x1e0] sm:$0xff] %vm1834, %v1822
      %1896 = vst.msk [vmem:[#allocation2 + $0x1e8] sm:$0xff] %vm1834, %v1823
      %1897 = vst.msk [vmem:[#allocation2 + $0x1f0] sm:$0xff] %vm1834, %v1824
      %1898 = vst.msk [vmem:[#allocation2 + $0x1f8] sm:$0xff] %vm1834, %v1825
      %1899 = vst.msk [vmem:[#allocation2 + $0x200] sm:$0xff] %vm1834, %v1826
      %1900 = vst.msk [vmem:[#allocation2 + $0x208] sm:$0xff] %vm1834, %v1827
      %1901 = vst.msk [vmem:[#allocation2 + $0x210] sm:$0xff] %vm1834, %v1828
      %1902 = vst.msk [vmem:[#allocation2 + $0x218] sm:$0xff] %vm1834, %v1829
      %1903 = vst.msk [vmem:[#allocation2 + $0x220] sm:$0xff] %vm1834, %v1830
      %1904 = vst.msk [vmem:[#allocation2 + $0x228] sm:$0xff] %vm1834, %v1831
      %1905 = vst.msk [vmem:[#allocation2 + $0x230] sm:$0xff] %vm1834, %v1832
      %1906 = vst.msk [vmem:[#allocation2 + $0x238] sm:$0xff] %vm1834, %v1833
      %p1907 = scmp.eq.s32.totalorder %s21, 1
      // Predicated region
      $region45: #{tpu_custom_call.1} parent=39 // pred_check
        %p1908 = pneg %p1907
      $region46: #{tpu_custom_call.1} parent=39 // pred_check_branch
        %1910 = sbr.rel (%p1908) target = $region48
      $region47: #{tpu_custom_call.1} parent=39 // pred_region
        %v1911 = vld [vmem:[#allocation2] sm:$0xff]
        %v1912 = vld [vmem:[#allocation2 + $0x8] sm:$0xff]
        %v1913 = vld [vmem:[#allocation2 + $0x10] sm:$0xff]
        %v1914 = vld [vmem:[#allocation2 + $0x18] sm:$0xff]
        %v1915 = vld [vmem:[#allocation2 + $0x20] sm:$0xff]
        %v1916 = vld [vmem:[#allocation2 + $0x28] sm:$0xff]
        %v1917 = vld [vmem:[#allocation2 + $0x30] sm:$0xff]
        %v1918 = vld [vmem:[#allocation2 + $0x38] sm:$0xff]
        %v1919 = vld [vmem:[#allocation2 + $0x40] sm:$0xff]
        %v1920 = vld [vmem:[#allocation2 + $0x48] sm:$0xff]
        %v1921 = vld [vmem:[#allocation2 + $0x50] sm:$0xff]
        %v1922 = vld [vmem:[#allocation2 + $0x58] sm:$0xff]
        %v1923 = vld [vmem:[#allocation2 + $0x60] sm:$0xff]
        %v1924 = vld [vmem:[#allocation2 + $0x68] sm:$0xff]
        %v1925 = vld [vmem:[#allocation2 + $0x70] sm:$0xff]
        %v1926 = vld [vmem:[#allocation2 + $0x78] sm:$0xff]
        %v1927 = vld [vmem:[#allocation2 + $0x80] sm:$0xff]
        %v1928 = vld [vmem:[#allocation2 + $0x88] sm:$0xff]
        %v1929 = vld [vmem:[#allocation2 + $0x90] sm:$0xff]
        %v1930 = vld [vmem:[#allocation2 + $0x98] sm:$0xff]
        %v1931 = vld [vmem:[#allocation2 + $0xa0] sm:$0xff]
        %v1932 = vld [vmem:[#allocation2 + $0xa8] sm:$0xff]
        %v1933 = vld [vmem:[#allocation2 + $0xb0] sm:$0xff]
        %v1934 = vld [vmem:[#allocation2 + $0xb8] sm:$0xff]
        %v1935 = vld [vmem:[#allocation2 + $0xc0] sm:$0xff]
        %v1936 = vld [vmem:[#allocation2 + $0xc8] sm:$0xff]
        %v1937 = vld [vmem:[#allocation2 + $0xd0] sm:$0xff]
        %v1938 = vld [vmem:[#allocation2 + $0xd8] sm:$0xff]
        %v1939 = vld [vmem:[#allocation2 + $0xe0] sm:$0xff]
        %v1940 = vld [vmem:[#allocation2 + $0xe8] sm:$0xff]
        %v1941 = vld [vmem:[#allocation2 + $0xf0] sm:$0xff]
        %v1942 = vld [vmem:[#allocation2 + $0xf8] sm:$0xff]
        %v1943 = vld [vmem:[#allocation2 + $0x100] sm:$0xff]
        %v1944 = vld [vmem:[#allocation2 + $0x108] sm:$0xff]
        %v1945 = vld [vmem:[#allocation2 + $0x110] sm:$0xff]
        %v1946 = vld [vmem:[#allocation2 + $0x118] sm:$0xff]
        %v1947 = vld [vmem:[#allocation2 + $0x120] sm:$0xff]
        %v1948 = vld [vmem:[#allocation2 + $0x128] sm:$0xff]
        %v1949 = vld [vmem:[#allocation2 + $0x130] sm:$0xff]
        %v1950 = vld [vmem:[#allocation2 + $0x138] sm:$0xff]
        %v1951 = vld [vmem:[#allocation2 + $0x140] sm:$0xff]
        %v1952 = vld [vmem:[#allocation2 + $0x148] sm:$0xff]
        %v1953 = vld [vmem:[#allocation2 + $0x150] sm:$0xff]
        %v1954 = vld [vmem:[#allocation2 + $0x158] sm:$0xff]
        %v1955 = vld [vmem:[#allocation2 + $0x160] sm:$0xff]
        %v1956 = vld [vmem:[#allocation2 + $0x168] sm:$0xff]
        %v1957 = vld [vmem:[#allocation2 + $0x170] sm:$0xff]
        %v1958 = vld [vmem:[#allocation2 + $0x178] sm:$0xff]
        %v1959 = vld [vmem:[#allocation2 + $0x180] sm:$0xff]
        %v1960 = vld [vmem:[#allocation2 + $0x188] sm:$0xff]
        %v1961 = vld [vmem:[#allocation2 + $0x190] sm:$0xff]
        %v1962 = vld [vmem:[#allocation2 + $0x198] sm:$0xff]
        %v1963 = vld [vmem:[#allocation2 + $0x1a0] sm:$0xff]
        %v1964 = vld [vmem:[#allocation2 + $0x1a8] sm:$0xff]
        %v1965 = vld [vmem:[#allocation2 + $0x1b0] sm:$0xff]
        %v1966 = vld [vmem:[#allocation2 + $0x1b8] sm:$0xff]
        %v1967 = vld [vmem:[#allocation2 + $0x1c0] sm:$0xff]
        %v1968 = vld [vmem:[#allocation2 + $0x1c8] sm:$0xff]
        %v1969 = vld [vmem:[#allocation2 + $0x1d0] sm:$0xff]
        %v1970 = vld [vmem:[#allocation2 + $0x1d8] sm:$0xff]
        %v1971 = vld [vmem:[#allocation2 + $0x1e0] sm:$0xff]
        %v1972 = vld [vmem:[#allocation2 + $0x1e8] sm:$0xff]
        %v1973 = vld [vmem:[#allocation2 + $0x1f0] sm:$0xff]
        %v1974 = vld [vmem:[#allocation2 + $0x1f8] sm:$0xff]
        %v1975 = vld [vmem:[#allocation2 + $0x200] sm:$0xff]
        %v1976 = vld [vmem:[#allocation2 + $0x208] sm:$0xff]
        %v1977 = vld [vmem:[#allocation2 + $0x210] sm:$0xff]
        %v1978 = vld [vmem:[#allocation2 + $0x218] sm:$0xff]
        %v1979 = vld [vmem:[#allocation2 + $0x220] sm:$0xff]
        %v1980 = vld [vmem:[#allocation2 + $0x228] sm:$0xff]
        %v1981 = vld [vmem:[#allocation2 + $0x230] sm:$0xff]
        %v1982 = vld [vmem:[#allocation2 + $0x238] sm:$0xff]
        %v1983 = vmul.f32 %v1911, 0.00390625
        %v1984 = vmul.f32 %v1912, 0.00390625
        %v1985 = vmul.f32 %v1913, 0.00390625
        %v1986 = vmul.f32 %v1914, 0.00390625
        %v1987 = vmul.f32 %v1915, 0.00390625
        %v1988 = vmul.f32 %v1916, 0.00390625
        %v1989 = vmul.f32 %v1917, 0.00390625
        %v1990 = vmul.f32 %v1918, 0.00390625
        %v1991 = vmul.f32 %v1919, 0.00390625
        %v1992 = vmul.f32 %v1920, 0.00390625
        %v1993 = vmul.f32 %v1921, 0.00390625
        %v1994 = vmul.f32 %v1922, 0.00390625
        %v1995 = vmul.f32 %v1923, 0.00390625
        %v1996 = vmul.f32 %v1924, 0.00390625
        %v1997 = vmul.f32 %v1925, 0.00390625
        %v1998 = vmul.f32 %v1926, 0.00390625
        %v1999 = vmul.f32 %v1927, 0.00390625
        %v2000 = vmul.f32 %v1928, 0.00390625
        %v2001 = vmul.f32 %v1929, 0.00390625
        %v2002 = vmul.f32 %v1930, 0.00390625
        %v2003 = vmul.f32 %v1931, 0.00390625
        %v2004 = vmul.f32 %v1932, 0.00390625
        %v2005 = vmul.f32 %v1933, 0.00390625
        %v2006 = vmul.f32 %v1934, 0.00390625
        %v2007 = vmul.f32 %v1935, 0.00390625
        %v2008 = vmul.f32 %v1936, 0.00390625
        %v2009 = vmul.f32 %v1937, 0.00390625
        %v2010 = vmul.f32 %v1938, 0.00390625
        %v2011 = vmul.f32 %v1939, 0.00390625
        %v2012 = vmul.f32 %v1940, 0.00390625
        %v2013 = vmul.f32 %v1941, 0.00390625
        %v2014 = vmul.f32 %v1942, 0.00390625
        %v2015 = vmul.f32 %v1943, 0.00390625
        %v2016 = vmul.f32 %v1944, 0.00390625
        %v2017 = vmul.f32 %v1945, 0.00390625
        %v2018 = vmul.f32 %v1946, 0.00390625
        %v2019 = vmul.f32 %v1947, 0.00390625
        %v2020 = vmul.f32 %v1948, 0.00390625
        %v2021 = vmul.f32 %v1949, 0.00390625
        %v2022 = vmul.f32 %v1950, 0.00390625
        %v2023 = vmul.f32 %v1951, 0.00390625
        %v2024 = vmul.f32 %v1952, 0.00390625
        %v2025 = vmul.f32 %v1953, 0.00390625
        %v2026 = vmul.f32 %v1954, 0.00390625
        %v2027 = vmul.f32 %v1955, 0.00390625
        %v2028 = vmul.f32 %v1956, 0.00390625
        %v2029 = vmul.f32 %v1957, 0.00390625
        %v2030 = vmul.f32 %v1958, 0.00390625
        %v2031 = vmul.f32 %v1959, 0.00390625
        %v2032 = vmul.f32 %v1960, 0.00390625
        %v2033 = vmul.f32 %v1961, 0.00390625
        %v2034 = vmul.f32 %v1962, 0.00390625
        %v2035 = vmul.f32 %v1963, 0.00390625
        %v2036 = vmul.f32 %v1964, 0.00390625
        %v2037 = vmul.f32 %v1965, 0.00390625
        %v2038 = vmul.f32 %v1966, 0.00390625
        %v2039 = vmul.f32 %v1967, 0.00390625
        %v2040 = vmul.f32 %v1968, 0.00390625
        %v2041 = vmul.f32 %v1969, 0.00390625
        %v2042 = vmul.f32 %v1970, 0.00390625
        %v2043 = vmul.f32 %v1971, 0.00390625
        %v2044 = vmul.f32 %v1972, 0.00390625
        %v2045 = vmul.f32 %v1973, 0.00390625
        %v2046 = vmul.f32 %v1974, 0.00390625
        %v2047 = vmul.f32 %v1975, 0.00390625
        %v2048 = vmul.f32 %v1976, 0.00390625
        %v2049 = vmul.f32 %v1977, 0.00390625
        %v2050 = vmul.f32 %v1978, 0.00390625
        %v2051 = vmul.f32 %v1979, 0.00390625
        %v2052 = vmul.f32 %v1980, 0.00390625
        %v2053 = vmul.f32 %v1981, 0.00390625
        %v2054 = vmul.f32 %v1982, 0.00390625
        %v2055 = vld [vmem:[%s3] sm:$0xff]
        %v2056 = vld [vmem:[%s3 + $0x8] sm:$0xff]
        %v2057 = vld [vmem:[%s3 + $0x10] sm:$0xff]
        %v2058 = vld [vmem:[%s3 + $0x18] sm:$0xff]
        %v2059 = vld [vmem:[%s3 + $0x20] sm:$0xff]
        %v2060 = vld [vmem:[%s4] sm:$0xff]
        %vm2061 = vcmask 523264
        %v2063 = vsel %vm2061, %v2059, 0
        %2065 = vmatprep.subr.mxu0 0.0
        %2066 = vmatpush1.msra.mxu0 %v1998
        %2067 = vmatprep.subr.mxu0 0.0
        %2068 = vmatpush1.msra.mxu0 %v1997
        %2069 = vmatprep.subr.mxu0 0.0
        %2070 = vmatpush1.msra.mxu0 %v1996
        %2071 = vmatprep.subr.mxu0 0.0
        %2072 = vmatpush1.msra.mxu0 %v1995
        %2073 = vmatprep.subr.mxu0 0.0
        %2074 = vmatpush1.msra.mxu0 %v1994
        %2075 = vmatprep.subr.mxu0 0.0
        %2076 = vmatpush1.msra.mxu0 %v1993
        %2077 = vmatprep.subr.mxu0 0.0
        %2078 = vmatpush1.msra.mxu0 %v1992
        %2079 = vmatprep.subr.mxu0 0.0
        %2080 = vmatpush1.msra.mxu0 %v1991
        %2081 = vmatprep.subr.mxu0 0.0
        %2082 = vmatpush1.msra.mxu0 %v1990
        %2083 = vmatprep.subr.mxu0 0.0
        %2084 = vmatpush1.msra.mxu0 %v1989
        %2085 = vmatprep.subr.mxu0 0.0
        %2086 = vmatpush1.msra.mxu0 %v1988
        %2087 = vmatprep.subr.mxu0 0.0
        %2088 = vmatpush1.msra.mxu0 %v1987
        %2089 = vmatprep.subr.mxu0 0.0
        %2090 = vmatpush1.msra.mxu0 %v1986
        %2091 = vmatprep.subr.mxu0 0.0
        %2092 = vmatpush1.msra.mxu0 %v1985
        %2093 = vmatprep.subr.mxu0 0.0
        %2094 = vmatpush1.msra.mxu0 %v1984
        %2095 = vmatprep.subr.mxu0 0.0
        %2096 = vmatpush1.msra.mxu0 %v1983
        %2097 = vmatprep.subr.mxu0 0.0
        %2098 = vmatpush2.msra.mxu0 %v2014
        %2099 = vmatprep.subr.mxu0 0.0
        %2100 = vmatpush2.msra.mxu0 %v2013
        %2101 = vmatprep.subr.mxu0 0.0
        %2102 = vmatpush2.msra.mxu0 %v2012
        %2103 = vmatprep.subr.mxu0 0.0
        %2104 = vmatpush2.msra.mxu0 %v2011
        %2105 = vmatprep.subr.mxu0 0.0
        %2106 = vmatpush2.msra.mxu0 %v2010
        %2107 = vmatprep.subr.mxu0 0.0
        %2108 = vmatpush2.msra.mxu0 %v2009
        %2109 = vmatprep.subr.mxu0 0.0
        %2110 = vmatpush2.msra.mxu0 %v2008
        %2111 = vmatprep.subr.mxu0 0.0
        %2112 = vmatpush2.msra.mxu0 %v2007
        %2113 = vmatprep.subr.mxu0 0.0
        %2114 = vmatpush2.msra.mxu0 %v2006
        %2115 = vmatprep.subr.mxu0 0.0
        %2116 = vmatpush2.msra.mxu0 %v2005
        %2117 = vmatprep.subr.mxu0 0.0
        %2118 = vmatpush2.msra.mxu0 %v2004
        %2119 = vmatprep.subr.mxu0 0.0
        %2120 = vmatpush2.msra.mxu0 %v2003
        %2121 = vmatprep.subr.mxu0 0.0
        %2122 = vmatpush2.msra.mxu0 %v2002
        %2123 = vmatprep.subr.mxu0 0.0
        %2124 = vmatpush2.msra.mxu0 %v2001
        %2125 = vmatprep.subr.mxu0 0.0
        %2126 = vmatpush2.msra.mxu0 %v2000
        %2127 = vmatprep.subr.mxu0 0.0
        %2128 = vmatpush2.msra.mxu0 %v1999
        %2129 = vmatprep.mubr.f32.mxu0 %v2056
        %2130 = vmatmul.mubr.f32.gmra.mxu0 %v2055
        %v2131 = vpop.f32.mrf.mxu0
        %v2132 = vadd.f32 %v2060, %v2131
        %v2133 = vpop.f32.mrf.mxu0
        %2134 = vdwg.mxu0
        %2135 = vmatprep.subr.mxu0 0.0
        %2136 = vmatpush1.msra.mxu0 %v2030
        %2137 = vmatprep.subr.mxu0 0.0
        %2138 = vmatpush1.msra.mxu0 %v2029
        %2139 = vmatprep.subr.mxu0 0.0
        %2140 = vmatpush1.msra.mxu0 %v2028
        %2141 = vmatprep.subr.mxu0 0.0
        %2142 = vmatpush1.msra.mxu0 %v2027
        %2143 = vmatprep.subr.mxu0 0.0
        %2144 = vmatpush1.msra.mxu0 %v2026
        %2145 = vmatprep.subr.mxu0 0.0
        %2146 = vmatpush1.msra.mxu0 %v2025
        %2147 = vmatprep.subr.mxu0 0.0
        %2148 = vmatpush1.msra.mxu0 %v2024
        %2149 = vmatprep.subr.mxu0 0.0
        %2150 = vmatpush1.msra.mxu0 %v2023
        %2151 = vmatprep.subr.mxu0 0.0
        %2152 = vmatpush1.msra.mxu0 %v2022
        %2153 = vmatprep.subr.mxu0 0.0
        %2154 = vmatpush1.msra.mxu0 %v2021
        %2155 = vmatprep.subr.mxu0 0.0
        %2156 = vmatpush1.msra.mxu0 %v2020
        %2157 = vmatprep.subr.mxu0 0.0
        %2158 = vmatpush1.msra.mxu0 %v2019
        %2159 = vmatprep.subr.mxu0 0.0
        %2160 = vmatpush1.msra.mxu0 %v2018
        %2161 = vmatprep.subr.mxu0 0.0
        %2162 = vmatpush1.msra.mxu0 %v2017
        %2163 = vmatprep.subr.mxu0 0.0
        %2164 = vmatpush1.msra.mxu0 %v2016
        %2165 = vmatprep.subr.mxu0 0.0
        %2166 = vmatpush1.msra.mxu0 %v2015
        %2167 = vmatprep.subr.mxu0 0.0
        %2168 = vmatpush2.msra.mxu0 %v2046
        %2169 = vmatprep.subr.mxu0 0.0
        %2170 = vmatpush2.msra.mxu0 %v2045
        %2171 = vmatprep.subr.mxu0 0.0
        %2172 = vmatpush2.msra.mxu0 %v2044
        %2173 = vmatprep.subr.mxu0 0.0
        %2174 = vmatpush2.msra.mxu0 %v2043
        %2175 = vmatprep.subr.mxu0 0.0
        %2176 = vmatpush2.msra.mxu0 %v2042
        %2177 = vmatprep.subr.mxu0 0.0
        %2178 = vmatpush2.msra.mxu0 %v2041
        %2179 = vmatprep.subr.mxu0 0.0
        %2180 = vmatpush2.msra.mxu0 %v2040
        %2181 = vmatprep.subr.mxu0 0.0
        %2182 = vmatpush2.msra.mxu0 %v2039
        %2183 = vmatprep.subr.mxu0 0.0
        %2184 = vmatpush2.msra.mxu0 %v2038
        %2185 = vmatprep.subr.mxu0 0.0
        %2186 = vmatpush2.msra.mxu0 %v2037
        %2187 = vmatprep.subr.mxu0 0.0
        %2188 = vmatpush2.msra.mxu0 %v2036
        %2189 = vmatprep.subr.mxu0 0.0
        %2190 = vmatpush2.msra.mxu0 %v2035
        %2191 = vmatprep.subr.mxu0 0.0
        %2192 = vmatpush2.msra.mxu0 %v2034
        %2193 = vmatprep.subr.mxu0 0.0
        %2194 = vmatpush2.msra.mxu0 %v2033
        %2195 = vmatprep.subr.mxu0 0.0
        %2196 = vmatpush2.msra.mxu0 %v2032
        %2197 = vmatprep.subr.mxu0 0.0
        %2198 = vmatpush2.msra.mxu0 %v2031
        %2199 = vmatprep.mubr.f32.mxu0 %v2058
        %2200 = vmatmul.mubr.f32.gmra.mxu0 %v2057
        %v2201 = vpop.f32.mrf.mxu0
        %v2202 = vadd.f32 %v2132, %v2201
        %v2203 = vpop.f32.mrf.mxu0
        %2204 = vdwg.mxu0
        %2205 = vmatprep.subr.mxu0 0.0
        %2206 = vmatpush1.msra.mxu0 0.0
        %2207 = vmatprep.subr.mxu0 0.0
        %2208 = vmatpush1.msra.mxu0 0.0
        %2209 = vmatprep.subr.mxu0 0.0
        %2210 = vmatpush1.msra.mxu0 0.0
        %2211 = vmatprep.subr.mxu0 0.0
        %2212 = vmatpush1.msra.mxu0 0.0
        %2213 = vmatprep.subr.mxu0 0.0
        %2214 = vmatpush1.msra.mxu0 0.0
        %2215 = vmatprep.subr.mxu0 0.0
        %2216 = vmatpush1.msra.mxu0 0.0
        %2217 = vmatprep.subr.mxu0 0.0
        %2218 = vmatpush1.msra.mxu0 0.0
        %2219 = vmatprep.subr.mxu0 0.0
        %2220 = vmatpush1.msra.mxu0 0.0
        %2221 = vmatprep.subr.mxu0 0.0
        %2222 = vmatpush1.msra.mxu0 %v2054
        %2223 = vmatprep.subr.mxu0 0.0
        %2224 = vmatpush1.msra.mxu0 %v2053
        %2225 = vmatprep.subr.mxu0 0.0
        %2226 = vmatpush1.msra.mxu0 %v2052
        %2227 = vmatprep.subr.mxu0 0.0
        %2228 = vmatpush1.msra.mxu0 %v2051
        %2229 = vmatprep.subr.mxu0 0.0
        %2230 = vmatpush1.msra.mxu0 %v2050
        %2231 = vmatprep.subr.mxu0 0.0
        %2232 = vmatpush1.msra.mxu0 %v2049
        %2233 = vmatprep.subr.mxu0 0.0
        %2234 = vmatpush1.msra.mxu0 %v2048
        %2235 = vmatprep.subr.mxu0 0.0
        %2236 = vmatpush1.msra.mxu0 %v2047
        %2237 = vmatprep.subr.mxu0 0.0
        %2238 = vmatpush2.msra.mxu0 0.0
        %2239 = vmatprep.subr.mxu0 0.0
        %2240 = vmatpush2.msra.mxu0 0.0
        %2241 = vmatprep.subr.mxu0 0.0
        %2242 = vmatpush2.msra.mxu0 0.0
        %2243 = vmatprep.subr.mxu0 0.0
        %2244 = vmatpush2.msra.mxu0 0.0
        %2245 = vmatprep.subr.mxu0 0.0
        %2246 = vmatpush2.msra.mxu0 0.0
        %2247 = vmatprep.subr.mxu0 0.0
        %2248 = vmatpush2.msra.mxu0 0.0
        %2249 = vmatprep.subr.mxu0 0.0
        %2250 = vmatpush2.msra.mxu0 0.0
        %2251 = vmatprep.subr.mxu0 0.0
        %2252 = vmatpush2.msra.mxu0 0.0
        %2253 = vmatprep.subr.mxu0 0.0
        %2254 = vmatpush2.msra.mxu0 0.0
        %2255 = vmatprep.subr.mxu0 0.0
        %2256 = vmatpush2.msra.mxu0 0.0
        %2257 = vmatprep.subr.mxu0 0.0
        %2258 = vmatpush2.msra.mxu0 0.0
        %2259 = vmatprep.subr.mxu0 0.0
        %2260 = vmatpush2.msra.mxu0 0.0
        %2261 = vmatprep.subr.mxu0 0.0
        %2262 = vmatpush2.msra.mxu0 0.0
        %2263 = vmatprep.subr.mxu0 0.0
        %2264 = vmatpush2.msra.mxu0 0.0
        %2265 = vmatprep.subr.mxu0 0.0
        %2266 = vmatpush2.msra.mxu0 0.0
        %2267 = vmatprep.subr.mxu0 0.0
        %2268 = vmatpush2.msra.mxu0 0.0
        %2269 = vmatprep.mubr.f32.mxu0 0.0
        %2270 = vmatmul.mubr.f32.gmra.mxu0 %v2063
        %v2271 = vpop.f32.mrf.mxu0
        %v2272 = vadd.f32 %v2202, %v2271
        %v2273 = vpop.f32.mrf.mxu0
        %2274 = vdwg.mxu0
        %2275 = vst.msk [vmem:[%s245] sm:$0xff] %vm1834, %v2272
      $region48: #{tpu_custom_call.1} parent=39 // pred_fallthru
        _
      %p2276 = scmp.lt.s32.totalorder %s20, 1
      %s2277 = scalar_select %p2276, %s20, 1
      %s2278 = smul.addr %s2277, 8
      %s2279 = scalar_lea.vmem %s5, %s2278
      // Predicated region
      $region49: #{tpu_custom_call.1} parent=39 // pred_check
        %p2280 = pneg %p158
      $region50: #{tpu_custom_call.1} parent=39 // pred_check_branch
        %2282 = sbr.rel (%p2280) target = $region52
      $region51: #{tpu_custom_call.1} parent=39 // pred_region
        _
      $region52: #{tpu_custom_call.1} parent=39 // pred_fallthru
        _
    $region40: #{tpu_custom_call.1} parent=5 // pred_fallthru
      _
    %p2283 = scmp.le.s32.totalorder 2, %s11
    // Predicated region
    $region53: #{tpu_custom_call.1} parent=5 // pred_check
      %p2284 = pneg %p2283
    $region54: #{tpu_custom_call.1} parent=5 // pred_check_branch
      %2286 = sbr.rel (%p2284) target = $region56
    $region55: #{tpu_custom_call.1} parent=5 // pred_region
      %s2287 = ssub.s32 %s11, 2
      // Predicated region
      $region57: #{tpu_custom_call.1} parent=55 // pred_check
        %p2288 = pneg %p164
      $region58: #{tpu_custom_call.1} parent=55 // pred_check_branch
        %2290 = sbr.rel (%p2288) target = $region60
      $region59: #{tpu_custom_call.1} parent=55 // pred_region
        %p2291 = scmp.lt.s32.totalorder %s22, 1
        %s2292 = scalar_select %p2291, %s22, 1
        %s2293 = smul.addr %s2292, 8
        %s2294 = scalar_lea.vmem %s5, %s2293
      $region60: #{tpu_custom_call.1} parent=55 // pred_fallthru
        _
    $region56: #{tpu_custom_call.1} parent=5 // pred_fallthru
      _
  $region6: #{tpu_custom_call.1} parent=0 // loop_footer
    %s15 = sadd.s32 1, %s11
  $region7: #{tpu_custom_call.1} parent=0 // loop_footer_branch
    %10 = sbr.rel target = $region3
  $region8: #{tpu_custom_call.1} parent=0 // loop_exit
    _

</llo_original>
